<compile_context>
chip_gen: v6e
topology: v6e:2x2x1
jax: 0.10.0
libtpu: 0.0.40
codegen_flags: <defaults>
</compile_context>

<pallas_src>
from functools import partial

import jax
import jax.numpy as jnp
from jax import lax
from jax.experimental import pallas as pl
from jax.experimental.pallas import tpu as pltpu

MATMUL_DTYPE = jnp.bfloat16   # matmul operands / weights; state & gate math stay f32
TIME_CHUNK = 64               # timesteps resident in VMEM per grid step


# ----------------------------------------------------------------------------
# Fused Pallas kernel: num_layers x LSTM  +  fc1 -> ReLU -> fc2  (per time chunk)
# ----------------------------------------------------------------------------
def _build_kernel(num_layers, Tc, Bp, H):
    """Kernel for static (num_layers, Tc, Bp, H).

    Refs (all whole-array VMEM blocks unless noted):
      x_ref                     : (Tc*Bp, Din0)  time-major chunk, batch padded to Bp
      per layer l:
        wih_ref                 : (Din_l, 4H)    gate-fused along lanes (i,f,g,o), W_ih^T
        whh_ref                 : (H, 4H)        gate-fused, W_hh^T
        b_ref                   : (1, 4H)        b_ih + b_hh
      w1_ref (H, Hh), b1_ref (1, Hh), w2_ref (Hh, Dpad), b2_ref (1, Dpad)
      out_ref                   : (Tc*Bp, Dpad)  lane-dense output chunk
      h_state, c_state scratch  : (num_layers, Bp, H) f32, carried across time chunks
      gx_ref scratch            : (Tc*Bp, 4H) f32   hoisted input projections
      seq_ref scratch           : (Tc*Bp, H)  f32   current layer's output sequence
    """

    def kernel(*refs):
        x_ref = refs[0]
        pos = 1
        layers = []
        for _ in range(num_layers):
            layers.append((refs[pos], refs[pos + 1], refs[pos + 2]))
            pos += 3
        w1_ref, b1_ref, w2_ref, b2_ref = refs[pos:pos + 4]
        pos += 4
        out_ref = refs[pos]
        h_state, c_state, gx_ref, seq_ref = refs[pos + 1:pos + 5]

        # Zero the carried recurrent state on the first time chunk only.
        @pl.when(pl.program_id(0) == 0)
        def _():
            h_state[...] = jnp.zeros_like(h_state)
            c_state[...] = jnp.zeros_like(c_state)

        unroll = True if Tc <= 16 else 4

        src = x_ref[...]                                    # (Tc*Bp, Din0) bf16
        for l, (wih_ref, whh_ref, b_ref) in enumerate(layers):
            # Hoisted input projection: one big lane-dense matmul for all timesteps.
            gx_ref[...] = (
                jnp.dot(src, wih_ref[...], preferred_element_type=jnp.float32)
                + b_ref[...]
            )

            whh = whh_ref[...]                              # (H, 4H) bf16, loop-invariant

            def step(t, carry, whh=whh):
                h_prev, c_prev = carry                      # f32 (Bp, H)
                row = pl.multiple_of(t * Bp, Bp)
                # Single full-width MXU op per step; gx read is lane-dense (Bp, 4H).
                pre = gx_ref[pl.ds(row, Bp), :] + jnp.dot(
                    h_prev.astype(MATMUL_DTYPE), whh,
                    preferred_element_type=jnp.float32)     # (Bp, 4H) f32
                # Fused activations over the whole 4H block; PyTorch gate order i,f,g,o.
                sig = jax.nn.sigmoid(pre)
                tnh = jnp.tanh(pre)
                i_g = sig[:, 0 * H:1 * H]
                f_g = sig[:, 1 * H:2 * H]
                g_g = tnh[:, 2 * H:3 * H]
                o_g = sig[:, 3 * H:4 * H]
                c_new = f_g * c_prev + i_g * g_g
                h_new = o_g * jnp.tanh(c_new)
                seq_ref[pl.ds(row, Bp), :] = h_new
                return h_new, c_new

            h_fin, c_fin = lax.fori_loop(
                0, Tc, step, (h_state[l], c_state[l]), unroll=unroll)
            h_state[l] = h_fin
            c_state[l] = c_fin

            src = seq_ref[...].astype(MATMUL_DTYPE)         # next layer / head operand

        # Dropout(p=0.5): eval-mode identity.
        # Head (per time chunk): fc1 -> ReLU -> fc2, lane-dense padded output.
        z = jnp.dot(src, w1_ref[...], preferred_element_type=jnp.float32) + b1_ref[...]
        z = jnp.maximum(z, 0.0).astype(MATMUL_DTYPE)
        y = jnp.dot(z, w2_ref[...], preferred_element_type=jnp.float32) + b2_ref[...]
        out_ref[...] = y.astype(out_ref.dtype)

    return kernel


# ----------------------------------------------------------------------------
# Wrappers (layout glue only)
# ----------------------------------------------------------------------------
def _round_up(n, m):
    return ((n + m - 1) // m) * m


def prepare_params(params):
    """One-time weight re-layout, cached OUTSIDE the per-call jit.

    PyTorch (4H, Din)/(4H, H) weights transpose directly into the gate-fused lane
    layout (Din, 4H)/(H, 4H) with columns in gate order i,f,g,o.  fc weights are
    pre-transposed; fc2 is padded to a lane-dense (128-multiple) output width.
    """
    H = params["fc1_w"].shape[1]
    Hh = params["fc1_w"].shape[0]
    Dout = params["fc2_w"].shape[0]
    Dpad = _round_up(Dout, 128)

    layers = []
    for (w_ih, w_hh, bias) in params["lstm"]:
        layers.append((
            w_ih.T.astype(MATMUL_DTYPE),                          # (Din, 4H)
            w_hh.T.astype(MATMUL_DTYPE),                          # (H, 4H)
            bias.reshape(1, 4 * H).astype(jnp.float32),           # (1, 4H)
        ))

    prep = {
        "layers": layers,
        "w1": params["fc1_w"].T.astype(MATMUL_DTYPE),                              # (H, Hh)
        "b1": params["fc1_b"].reshape(1, Hh).astype(jnp.float32),
        "w2": jnp.pad(params["fc2_w"].T, ((0, 0), (0, Dpad - Dout))).astype(MATMUL_DTYPE),
        "b2": jnp.pad(params["fc2_b"], (0, Dpad - Dout)).reshape(1, Dpad).astype(jnp.float32),
    }
    return jax.device_put(prep), Dout


@partial(jax.jit, static_argnames=("out_dim",))
def lstm_gru_rnn_forward(x_btd, prep, *, out_dim):
    """Full module forward. x_btd: (B, T, input_dim) -> (B, T, output_dim)."""
    B, T, din0 = x_btd.shape
    H = prep["w1"].shape[0]
    Hh = prep["w1"].shape[1]
    Dpad = prep["w2"].shape[1]
    num_layers = len(prep["layers"])

    Bp = _round_up(B, 8)                  # full sublane tile
    Tc = min(T, TIME_CHUNK)               # timesteps resident per grid step
    Tp = _round_up(T, Tc)
    NC = Tp // Tc

    # batch_first (B,T,D) -> time-major, pad batch/time, flatten to (Tp*Bp, D), bf16.
    x = jnp.transpose(x_btd, (1, 0, 2))
    x = jnp.pad(x, ((0, Tp - T), (0, Bp - B), (0, 0)))
    x_flat = x.reshape(Tp * Bp, din0).astype(MATMUL_DTYPE)

    const = lambda c: (0, 0)
    inputs = [x_flat]
    in_specs = [pl.BlockSpec((Tc * Bp, din0), lambda c: (c, 0))]
    for (wih, whh, b) in prep["layers"]:
        inputs += [wih, whh, b]
        in_specs += [pl.BlockSpec(wih.shape, const),
                     pl.BlockSpec(whh.shape, const),
                     pl.BlockSpec(b.shape, const)]
    for name in ("w1", "b1", "w2", "b2"):
        inputs.append(prep[name])
        in_specs.append(pl.BlockSpec(prep[name].shape, const))

    kernel = _build_kernel(num_layers, Tc, Bp, H)

    # Size the scoped-VMEM limit from the actual buffers (defaults are 16/32 MiB).
    mm_bytes = 2 if MATMUL_DTYPE == jnp.bfloat16 else 4
    weight_bytes = sum(int(a.size) * a.dtype.itemsize for a in inputs[1:])
    block_bytes = Tc * Bp * (din0 * mm_bytes + Dpad * 4)          # x-in + out blocks
    scratch_bytes = (2 * num_layers * Bp * H + Tc * Bp * (4 * H + H)) * 4
    interm_bytes = Tc * Bp * (4 * H + H + Hh + Dpad) * 4
    est = 2 * block_bytes + weight_bytes + scratch_bytes + 2 * interm_bytes
    vmem_limit = int(min(112 * 2**20, max(32 * 2**20, 2 * est + (2 << 20))))

    out_pad = pl.pallas_call(
        kernel,
        out_shape=jax.ShapeDtypeStruct((Tp * Bp, Dpad), jnp.float32),
        grid_spec=pltpu.PrefetchScalarGridSpec(
            num_scalar_prefetch=0,
            grid=(NC,),
            in_specs=in_specs,
            out_specs=pl.BlockSpec((Tc * Bp, Dpad), lambda c: (c, 0)),
            scratch_shapes=[
                pltpu.VMEM((num_layers, Bp, H), jnp.float32),   # carried h per layer
                pltpu.VMEM((num_layers, Bp, H), jnp.float32),   # carried c per layer
                pltpu.VMEM((Tc * Bp, 4 * H), jnp.float32),      # hoisted input projections
                pltpu.VMEM((Tc * Bp, H), jnp.float32),          # per-layer output sequence
            ]),
        compiler_params=pltpu.CompilerParams(
            dimension_semantics=("arbitrary",),   # recurrent state carried across chunks
            vmem_limit_bytes=vmem_limit),
    )(*inputs)

    y = out_pad.reshape(Tp, Bp, Dpad)[:T, :B, :out_dim]
    return jnp.transpose(y, (1, 0, 2))            # back to (B, T, Dout)


# ----------------------------------------------------------------------------
# Parameter init (PyTorch-shaped) and pure-jnp references
# ----------------------------------------------------------------------------
def init_params(key, input_dim, hidden_dim, num_layers, output_dim):
    """Deterministic init matching PyTorch parameter shapes (U(-1/sqrt(H), 1/sqrt(H)))."""
    H = hidden_dim
    bound = 1.0 / jnp.sqrt(jnp.float32(H))
    params = {"lstm": []}
    for layer in range(num_layers):
        d_in = input_dim if layer == 0 else H
        key, k1, k2, k3, k4 = jax.random.split(key, 5)
        w_ih = jax.random.uniform(k1, (4 * H, d_in), jnp.float32, -bound, bound)
        w_hh = jax.random.uniform(k2, (4 * H, H), jnp.float32, -bound, bound)
        b_ih = jax.random.uniform(k3, (4 * H,), jnp.float32, -bound, bound)
        b_hh = jax.random.uniform(k4, (4 * H,), jnp.float32, -bound, bound)
        params["lstm"].append((w_ih, w_hh, b_ih + b_hh))

    key, k1, k2, k3, k4 = jax.random.split(key, 5)
    b1l = 1.0 / jnp.sqrt(jnp.float32(H))
    params["fc1_w"] = jax.random.uniform(k1, (H // 2, H), jnp.float32, -b1l, b1l)
    params["fc1_b"] = jax.random.uniform(k2, (H // 2,), jnp.float32, -b1l, b1l)
    b2l = 1.0 / jnp.sqrt(jnp.float32(H // 2))
    params["fc2_w"] = jax.random.uniform(k3, (output_dim, H // 2), jnp.float32, -b2l, b2l)
    params["fc2_b"] = jax.random.uniform(k4, (output_dim,), jnp.float32, -b2l, b2l)
    return params


def _reference_forward(x_btd, params, matmul_dtype):
    """Pure-jnp reference; `matmul_dtype` controls operand rounding (f32 = exact,
    MATMUL_DTYPE = same rounding as the kernel's matmul operands)."""
    f32 = jnp.float32
    cast = lambda a: a.astype(matmul_dtype)
    x = jnp.transpose(x_btd, (1, 0, 2)).astype(f32)   # (T, B, D)
    T, B, _ = x.shape
    seq = x
    for (w_ih, w_hh, bias) in params["lstm"]:
        H = w_hh.shape[1]
        gx = jnp.dot(cast(seq), cast(w_ih.T), preferred_element_type=f32) + bias
        h = jnp.zeros((B, H), f32)
        c = jnp.zeros((B, H), f32)
        outs = []
        for t in range(T):
            pre = gx[t] + jnp.dot(cast(h), cast(w_hh.T), preferred_element_type=f32)
            i = jax.nn.sigmoid(pre[:, 0 * H:1 * H])
            f = jax.nn.sigmoid(pre[:, 1 * H:2 * H])
            g = jnp.tanh(pre[:, 2 * H:3 * H])
            o = jax.nn.sigmoid(pre[:, 3 * H:4 * H])
            c = f * c + i * g
            h = o * jnp.tanh(c)
            outs.append(h)
        seq = jnp.stack(outs, axis=0)
    z = jnp.maximum(
        jnp.dot(cast(seq), cast(params["fc1_w"].T), preferred_element_type=f32)
        + params["fc1_b"], 0.0)
    y = jnp.dot(cast(z), cast(params["fc2_w"].T), preferred_element_type=f32) + params["fc2_b"]
    return jnp.transpose(y, (1, 0, 2))


if __name__ == "__main__":
    # Small shapes consistent with the module: batch=2, seq=8, input_dim=16,
    # hidden_dim=32, num_layers=2, output_dim=8.
    B, T, INPUT_DIM, HIDDEN_DIM, NUM_LAYERS, OUTPUT_DIM = 2, 8, 16, 32, 2, 8

    key = jax.random.PRNGKey(0)
    key, xkey = jax.random.split(key)
    x = jax.random.normal(xkey, (B, T, INPUT_DIM), jnp.float32)

    params = init_params(key, INPUT_DIM, HIDDEN_DIM, NUM_LAYERS, OUTPUT_DIM)
    prep, out_dim = prepare_params(params)      # one-time weight re-layout (outside jit)

    out = lstm_gru_rnn_forward(x, prep, out_dim=out_dim)
    jax.block_until_ready(out)

    assert out.shape == (B, T, OUTPUT_DIM), out.shape
    assert bool(jnp.all(jnp.isfinite(out)))

    # (1) Reference with the same bf16 operand rounding as the kernel (tight check).
    ref_matched = _reference_forward(x, params, MATMUL_DTYPE)
    err_matched = float(jnp.max(jnp.abs(out - ref_matched)))
    assert err_matched < 5e-3, f"matched-ref error {err_matched}"

    # (2) Exact f32 PyTorch-semantics reference (tolerance covers bf16 operand rounding).
    with jax.default_matmul_precision("highest"):
        ref_exact = _reference_forward(x, params, jnp.float32)
    err_exact = float(jnp.max(jnp.abs(out - ref_exact)))
    assert err_exact < 3e-2, f"exact-ref error {err_exact}"

    print("KERNEL_OK")
</pallas_src>

<mosaic_0001>
module attributes {stable_mosaic.version = 11 : i64} {
  func.func @kernel(%arg0: i32, %arg1: memref<64x16xbf16, #tpu.memory_space<vmem>>, %arg2: memref<16x128xbf16, #tpu.memory_space<vmem>>, %arg3: memref<32x128xbf16, #tpu.memory_space<vmem>>, %arg4: memref<1x128xf32, #tpu.memory_space<vmem>>, %arg5: memref<32x128xbf16, #tpu.memory_space<vmem>>, %arg6: memref<32x128xbf16, #tpu.memory_space<vmem>>, %arg7: memref<1x128xf32, #tpu.memory_space<vmem>>, %arg8: memref<32x16xbf16, #tpu.memory_space<vmem>>, %arg9: memref<1x16xf32, #tpu.memory_space<vmem>>, %arg10: memref<16x128xbf16, #tpu.memory_space<vmem>>, %arg11: memref<1x128xf32, #tpu.memory_space<vmem>>, %arg12: memref<64x128xf32, #tpu.memory_space<vmem>>, %arg13: memref<2x8x32xf32, #tpu.memory_space<vmem>>, %arg14: memref<2x8x32xf32, #tpu.memory_space<vmem>>, %arg15: memref<64x128xf32, #tpu.memory_space<vmem>>, %arg16: memref<64x32xf32, #tpu.memory_space<vmem>>) attributes {dimension_semantics = [#tpu.dimension_semantics<arbitrary>], iteration_bounds = array<i64: 1>, scalar_prefetch = 0 : i64, scratch_operands = 4 : i64, tpu.core_type = #tpu.core_type<tc>, window_params = [{transform_indices = @transform_0, window_bounds = array<i64: 64, 16>}, {pipeline_mode = #tpu.pipeline_mode<synchronous>, transform_indices = @transform_1, window_bounds = array<i64: 16, 128>}, {pipeline_mode = #tpu.pipeline_mode<synchronous>, transform_indices = @transform_2, window_bounds = array<i64: 32, 128>}, {pipeline_mode = #tpu.pipeline_mode<synchronous>, transform_indices = @transform_3, window_bounds = array<i64: 1, 128>}, {pipeline_mode = #tpu.pipeline_mode<synchronous>, transform_indices = @transform_4, window_bounds = array<i64: 32, 128>}, {pipeline_mode = #tpu.pipeline_mode<synchronous>, transform_indices = @transform_5, window_bounds = array<i64: 32, 128>}, {pipeline_mode = #tpu.pipeline_mode<synchronous>, transform_indices = @transform_6, window_bounds = array<i64: 1, 128>}, {pipeline_mode = #tpu.pipeline_mode<synchronous>, transform_indices = @transform_7, window_bounds = array<i64: 32, 16>}, {pipeline_mode = #tpu.pipeline_mode<synchronous>, transform_indices = @transform_8, window_bounds = array<i64: 1, 16>}, {pipeline_mode = #tpu.pipeline_mode<synchronous>, transform_indices = @transform_9, window_bounds = array<i64: 16, 128>}, {pipeline_mode = #tpu.pipeline_mode<synchronous>, transform_indices = @transform_10, window_bounds = array<i64: 1, 128>}, {transform_indices = @transform_11, window_bounds = array<i64: 64, 128>}]} {
    %c0_i32 = arith.constant 0 : i32
    %0 = arith.cmpi eq, %arg0, %c0_i32 : i32
    %1 = arith.extui %0 : i1 to i32
    %c0_i32_0 = arith.constant 0 : i32
    %2 = arith.cmpi ne, %1, %c0_i32_0 : i32
    scf.if %2 {
      %cst_149 = arith.constant 0.000000e+00 : f32
      %440 = vector.broadcast %cst_149 : f32 to vector<2x8x32xf32>
      %c0_150 = arith.constant 0 : index
      %c0_151 = arith.constant 0 : index
      %c0_152 = arith.constant 0 : index
      %441 = vector.load %arg13[%c0_150, %c0_151, %c0_152] : memref<2x8x32xf32, #tpu.memory_space<vmem>>, vector<2x8x32xf32>
      tpu.vector_store %arg13[%c0_150, %c0_151, %c0_152], %440 {strides = array<i32>} : memref<2x8x32xf32, #tpu.memory_space<vmem>>, vector<2x8x32xf32>,
      %cst_153 = arith.constant 0.000000e+00 : f32
      %442 = vector.broadcast %cst_153 : f32 to vector<2x8x32xf32>
      %c0_154 = arith.constant 0 : index
      %c0_155 = arith.constant 0 : index
      %c0_156 = arith.constant 0 : index
      %443 = vector.load %arg14[%c0_154, %c0_155, %c0_156] : memref<2x8x32xf32, #tpu.memory_space<vmem>>, vector<2x8x32xf32>
      tpu.vector_store %arg14[%c0_154, %c0_155, %c0_156], %442 {strides = array<i32>} : memref<2x8x32xf32, #tpu.memory_space<vmem>>, vector<2x8x32xf32>,
    } else {
    }
    %c0 = arith.constant 0 : index
    %c0_1 = arith.constant 0 : index
    %3 = vector.load %arg1[%c0, %c0_1] : memref<64x16xbf16, #tpu.memory_space<vmem>>, vector<64x16xbf16>
    %c0_2 = arith.constant 0 : index
    %c0_3 = arith.constant 0 : index
    %4 = vector.load %arg2[%c0_2, %c0_3] : memref<16x128xbf16, #tpu.memory_space<vmem>>, vector<16x128xbf16>
    %cst = arith.constant dense<0.000000e+00> : vector<64x128xf32>
    %5 = tpu.matmul %3, %4, %cst {dimension_numbers = #tpu.dot_dimension_numbers<[1], [0], [0], [1], [0, 0, 1, 1], [], []>} : vector<64x16xbf16>, vector<16x128xbf16>, vector<64x128xf32> -> vector<64x128xf32>
    %c0_4 = arith.constant 0 : index
    %c0_5 = arith.constant 0 : index
    %6 = vector.load %arg4[%c0_4, %c0_5] : memref<1x128xf32, #tpu.memory_space<vmem>>, vector<1x128xf32>
    %7 = vector.broadcast %6 : vector<1x128xf32> to vector<64x128xf32>
    %8 = arith.addf %5, %7 : vector<64x128xf32>
    %c0_6 = arith.constant 0 : index
    %c0_7 = arith.constant 0 : index
    %9 = vector.load %arg15[%c0_6, %c0_7] : memref<64x128xf32, #tpu.memory_space<vmem>>, vector<64x128xf32>
    tpu.vector_store %arg15[%c0_6, %c0_7], %8 {strides = array<i32>} : memref<64x128xf32, #tpu.memory_space<vmem>>, vector<64x128xf32>,
    %c0_8 = arith.constant 0 : index
    %c0_9 = arith.constant 0 : index
    %10 = vector.load %arg3[%c0_8, %c0_9] : memref<32x128xbf16, #tpu.memory_space<vmem>>, vector<32x128xbf16>
    %c0_10 = arith.constant 0 : index
    %c0_11 = arith.constant 0 : index
    %c0_12 = arith.constant 0 : index
    %11 = vector.load %arg13[%c0_10, %c0_11, %c0_12] : memref<2x8x32xf32, #tpu.memory_space<vmem>>, vector<1x8x32xf32>
    %12 = vector.shape_cast %11 : vector<1x8x32xf32> to vector<8x32xf32>
    %c0_13 = arith.constant 0 : index
    %c0_14 = arith.constant 0 : index
    %c0_15 = arith.constant 0 : index
    %13 = vector.load %arg14[%c0_13, %c0_14, %c0_15] : memref<2x8x32xf32, #tpu.memory_space<vmem>>, vector<1x8x32xf32>
    %14 = vector.shape_cast %13 : vector<1x8x32xf32> to vector<8x32xf32>
    %c0_i32_16 = arith.constant 0 : i32
    %c8_i32 = arith.constant 8 : i32
    %15 = arith.muli %c0_i32_16, %c8_i32 : i32
    %16 = tpu.assume_multiple %15, 8 : i32
    %17 = arith.index_cast %16 : i32 to index
    %c0_17 = arith.constant 0 : index
    %18 = vector.load %arg15[%17, %c0_17] : memref<64x128xf32, #tpu.memory_space<vmem>>, vector<8x128xf32>
    %19 = arith.truncf %12 : vector<8x32xf32> to vector<8x32xbf16>
    %cst_18 = arith.constant dense<0.000000e+00> : vector<8x128xf32>
    %20 = tpu.matmul %19, %10, %cst_18 {dimension_numbers = #tpu.dot_dimension_numbers<[1], [0], [0], [1], [0, 0, 1, 1], [], []>} : vector<8x32xbf16>, vector<32x128xbf16>, vector<8x128xf32> -> vector<8x128xf32>
    %21 = arith.addf %18, %20 : vector<8x128xf32>
    %22 = arith.negf %21 : vector<8x128xf32>
    %23 = math.exp %22 : vector<8x128xf32>
    %cst_19 = arith.constant 1.000000e+00 : f32
    %24 = vector.broadcast %cst_19 : f32 to vector<8x128xf32>
    %25 = arith.addf %24, %23 : vector<8x128xf32>
    %26 = arith.divf %24, %25 : vector<8x128xf32>
    %27 = math.tanh %21 : vector<8x128xf32>
    %28 = vector.extract_strided_slice %26 {offsets = [0, 0], sizes = [8, 32], strides = [1, 1]} : vector<8x128xf32> to vector<8x32xf32>
    %29 = vector.extract_strided_slice %26 {offsets = [0, 32], sizes = [8, 32], strides = [1, 1]} : vector<8x128xf32> to vector<8x32xf32>
    %30 = vector.extract_strided_slice %27 {offsets = [0, 64], sizes = [8, 32], strides = [1, 1]} : vector<8x128xf32> to vector<8x32xf32>
    %31 = vector.extract_strided_slice %26 {offsets = [0, 96], sizes = [8, 32], strides = [1, 1]} : vector<8x128xf32> to vector<8x32xf32>
    %32 = arith.mulf %29, %14 : vector<8x32xf32>
    %33 = arith.mulf %28, %30 : vector<8x32xf32>
    %34 = arith.addf %32, %33 : vector<8x32xf32>
    %35 = math.tanh %34 : vector<8x32xf32>
    %36 = arith.mulf %31, %35 : vector<8x32xf32>
    %37 = arith.index_cast %16 : i32 to index
    %c0_20 = arith.constant 0 : index
    %38 = vector.load %arg16[%37, %c0_20] : memref<64x32xf32, #tpu.memory_space<vmem>>, vector<8x32xf32>
    tpu.vector_store %arg16[%37, %c0_20], %36 {strides = array<i32>} : memref<64x32xf32, #tpu.memory_space<vmem>>, vector<8x32xf32>,
    %c1_i32 = arith.constant 1 : i32
    %c8_i32_21 = arith.constant 8 : i32
    %39 = arith.muli %c1_i32, %c8_i32_21 : i32
    %40 = tpu.assume_multiple %39, 8 : i32
    %41 = arith.index_cast %40 : i32 to index
    %c0_22 = arith.constant 0 : index
    %42 = vector.load %arg15[%41, %c0_22] : memref<64x128xf32, #tpu.memory_space<vmem>>, vector<8x128xf32>
    %43 = arith.truncf %36 : vector<8x32xf32> to vector<8x32xbf16>
    %cst_23 = arith.constant dense<0.000000e+00> : vector<8x128xf32>
    %44 = tpu.matmul %43, %10, %cst_23 {dimension_numbers = #tpu.dot_dimension_numbers<[1], [0], [0], [1], [0, 0, 1, 1], [], []>} : vector<8x32xbf16>, vector<32x128xbf16>, vector<8x128xf32> -> vector<8x128xf32>
    %45 = arith.addf %42, %44 : vector<8x128xf32>
    %46 = arith.negf %45 : vector<8x128xf32>
    %47 = math.exp %46 : vector<8x128xf32>
    %cst_24 = arith.constant 1.000000e+00 : f32
    %48 = vector.broadcast %cst_24 : f32 to vector<8x128xf32>
    %49 = arith.addf %48, %47 : vector<8x128xf32>
    %50 = arith.divf %48, %49 : vector<8x128xf32>
    %51 = math.tanh %45 : vector<8x128xf32>
    %52 = vector.extract_strided_slice %50 {offsets = [0, 0], sizes = [8, 32], strides = [1, 1]} : vector<8x128xf32> to vector<8x32xf32>
    %53 = vector.extract_strided_slice %50 {offsets = [0, 32], sizes = [8, 32], strides = [1, 1]} : vector<8x128xf32> to vector<8x32xf32>
    %54 = vector.extract_strided_slice %51 {offsets = [0, 64], sizes = [8, 32], strides = [1, 1]} : vector<8x128xf32> to vector<8x32xf32>
    %55 = vector.extract_strided_slice %50 {offsets = [0, 96], sizes = [8, 32], strides = [1, 1]} : vector<8x128xf32> to vector<8x32xf32>
    %56 = arith.mulf %53, %34 : vector<8x32xf32>
    %57 = arith.mulf %52, %54 : vector<8x32xf32>
    %58 = arith.addf %56, %57 : vector<8x32xf32>
    %59 = math.tanh %58 : vector<8x32xf32>
    %60 = arith.mulf %55, %59 : vector<8x32xf32>
    %61 = arith.index_cast %40 : i32 to index
    %c0_25 = arith.constant 0 : index
    %62 = vector.load %arg16[%61, %c0_25] : memref<64x32xf32, #tpu.memory_space<vmem>>, vector<8x32xf32>
    tpu.vector_store %arg16[%61, %c0_25], %60 {strides = array<i32>} : memref<64x32xf32, #tpu.memory_space<vmem>>, vector<8x32xf32>,
    %c2_i32 = arith.constant 2 : i32
    %c8_i32_26 = arith.constant 8 : i32
    %63 = arith.muli %c2_i32, %c8_i32_26 : i32
    %64 = tpu.assume_multiple %63, 8 : i32
    %65 = arith.index_cast %64 : i32 to index
    %c0_27 = arith.constant 0 : index
    %66 = vector.load %arg15[%65, %c0_27] : memref<64x128xf32, #tpu.memory_space<vmem>>, vector<8x128xf32>
    %67 = arith.truncf %60 : vector<8x32xf32> to vector<8x32xbf16>
    %cst_28 = arith.constant dense<0.000000e+00> : vector<8x128xf32>
    %68 = tpu.matmul %67, %10, %cst_28 {dimension_numbers = #tpu.dot_dimension_numbers<[1], [0], [0], [1], [0, 0, 1, 1], [], []>} : vector<8x32xbf16>, vector<32x128xbf16>, vector<8x128xf32> -> vector<8x128xf32>
    %69 = arith.addf %66, %68 : vector<8x128xf32>
    %70 = arith.negf %69 : vector<8x128xf32>
    %71 = math.exp %70 : vector<8x128xf32>
    %cst_29 = arith.constant 1.000000e+00 : f32
    %72 = vector.broadcast %cst_29 : f32 to vector<8x128xf32>
    %73 = arith.addf %72, %71 : vector<8x128xf32>
    %74 = arith.divf %72, %73 : vector<8x128xf32>
    %75 = math.tanh %69 : vector<8x128xf32>
    %76 = vector.extract_strided_slice %74 {offsets = [0, 0], sizes = [8, 32], strides = [1, 1]} : vector<8x128xf32> to vector<8x32xf32>
    %77 = vector.extract_strided_slice %74 {offsets = [0, 32], sizes = [8, 32], strides = [1, 1]} : vector<8x128xf32> to vector<8x32xf32>
    %78 = vector.extract_strided_slice %75 {offsets = [0, 64], sizes = [8, 32], strides = [1, 1]} : vector<8x128xf32> to vector<8x32xf32>
    %79 = vector.extract_strided_slice %74 {offsets = [0, 96], sizes = [8, 32], strides = [1, 1]} : vector<8x128xf32> to vector<8x32xf32>
    %80 = arith.mulf %77, %58 : vector<8x32xf32>
    %81 = arith.mulf %76, %78 : vector<8x32xf32>
    %82 = arith.addf %80, %81 : vector<8x32xf32>
    %83 = math.tanh %82 : vector<8x32xf32>
    %84 = arith.mulf %79, %83 : vector<8x32xf32>
    %85 = arith.index_cast %64 : i32 to index
    %c0_30 = arith.constant 0 : index
    %86 = vector.load %arg16[%85, %c0_30] : memref<64x32xf32, #tpu.memory_space<vmem>>, vector<8x32xf32>
    tpu.vector_store %arg16[%85, %c0_30], %84 {strides = array<i32>} : memref<64x32xf32, #tpu.memory_space<vmem>>, vector<8x32xf32>,
    %c3_i32 = arith.constant 3 : i32
    %c8_i32_31 = arith.constant 8 : i32
    %87 = arith.muli %c3_i32, %c8_i32_31 : i32
    %88 = tpu.assume_multiple %87, 8 : i32
    %89 = arith.index_cast %88 : i32 to index
    %c0_32 = arith.constant 0 : index
    %90 = vector.load %arg15[%89, %c0_32] : memref<64x128xf32, #tpu.memory_space<vmem>>, vector<8x128xf32>
    %91 = arith.truncf %84 : vector<8x32xf32> to vector<8x32xbf16>
    %cst_33 = arith.constant dense<0.000000e+00> : vector<8x128xf32>
    %92 = tpu.matmul %91, %10, %cst_33 {dimension_numbers = #tpu.dot_dimension_numbers<[1], [0], [0], [1], [0, 0, 1, 1], [], []>} : vector<8x32xbf16>, vector<32x128xbf16>, vector<8x128xf32> -> vector<8x128xf32>
    %93 = arith.addf %90, %92 : vector<8x128xf32>
    %94 = arith.negf %93 : vector<8x128xf32>
    %95 = math.exp %94 : vector<8x128xf32>
    %cst_34 = arith.constant 1.000000e+00 : f32
    %96 = vector.broadcast %cst_34 : f32 to vector<8x128xf32>
    %97 = arith.addf %96, %95 : vector<8x128xf32>
    %98 = arith.divf %96, %97 : vector<8x128xf32>
    %99 = math.tanh %93 : vector<8x128xf32>
    %100 = vector.extract_strided_slice %98 {offsets = [0, 0], sizes = [8, 32], strides = [1, 1]} : vector<8x128xf32> to vector<8x32xf32>
    %101 = vector.extract_strided_slice %98 {offsets = [0, 32], sizes = [8, 32], strides = [1, 1]} : vector<8x128xf32> to vector<8x32xf32>
    %102 = vector.extract_strided_slice %99 {offsets = [0, 64], sizes = [8, 32], strides = [1, 1]} : vector<8x128xf32> to vector<8x32xf32>
    %103 = vector.extract_strided_slice %98 {offsets = [0, 96], sizes = [8, 32], strides = [1, 1]} : vector<8x128xf32> to vector<8x32xf32>
    %104 = arith.mulf %101, %82 : vector<8x32xf32>
    %105 = arith.mulf %100, %102 : vector<8x32xf32>
    %106 = arith.addf %104, %105 : vector<8x32xf32>
    %107 = math.tanh %106 : vector<8x32xf32>
    %108 = arith.mulf %103, %107 : vector<8x32xf32>
    %109 = arith.index_cast %88 : i32 to index
    %c0_35 = arith.constant 0 : index
    %110 = vector.load %arg16[%109, %c0_35] : memref<64x32xf32, #tpu.memory_space<vmem>>, vector<8x32xf32>
    tpu.vector_store %arg16[%109, %c0_35], %108 {strides = array<i32>} : memref<64x32xf32, #tpu.memory_space<vmem>>, vector<8x32xf32>,
    %c4_i32 = arith.constant 4 : i32
    %c8_i32_36 = arith.constant 8 : i32
    %111 = arith.muli %c4_i32, %c8_i32_36 : i32
    %112 = tpu.assume_multiple %111, 8 : i32
    %113 = arith.index_cast %112 : i32 to index
    %c0_37 = arith.constant 0 : index
    %114 = vector.load %arg15[%113, %c0_37] : memref<64x128xf32, #tpu.memory_space<vmem>>, vector<8x128xf32>
    %115 = arith.truncf %108 : vector<8x32xf32> to vector<8x32xbf16>
    %cst_38 = arith.constant dense<0.000000e+00> : vector<8x128xf32>
    %116 = tpu.matmul %115, %10, %cst_38 {dimension_numbers = #tpu.dot_dimension_numbers<[1], [0], [0], [1], [0, 0, 1, 1], [], []>} : vector<8x32xbf16>, vector<32x128xbf16>, vector<8x128xf32> -> vector<8x128xf32>
    %117 = arith.addf %114, %116 : vector<8x128xf32>
    %118 = arith.negf %117 : vector<8x128xf32>
    %119 = math.exp %118 : vector<8x128xf32>
    %cst_39 = arith.constant 1.000000e+00 : f32
    %120 = vector.broadcast %cst_39 : f32 to vector<8x128xf32>
    %121 = arith.addf %120, %119 : vector<8x128xf32>
    %122 = arith.divf %120, %121 : vector<8x128xf32>
    %123 = math.tanh %117 : vector<8x128xf32>
    %124 = vector.extract_strided_slice %122 {offsets = [0, 0], sizes = [8, 32], strides = [1, 1]} : vector<8x128xf32> to vector<8x32xf32>
    %125 = vector.extract_strided_slice %122 {offsets = [0, 32], sizes = [8, 32], strides = [1, 1]} : vector<8x128xf32> to vector<8x32xf32>
    %126 = vector.extract_strided_slice %123 {offsets = [0, 64], sizes = [8, 32], strides = [1, 1]} : vector<8x128xf32> to vector<8x32xf32>
    %127 = vector.extract_strided_slice %122 {offsets = [0, 96], sizes = [8, 32], strides = [1, 1]} : vector<8x128xf32> to vector<8x32xf32>
    %128 = arith.mulf %125, %106 : vector<8x32xf32>
    %129 = arith.mulf %124, %126 : vector<8x32xf32>
    %130 = arith.addf %128, %129 : vector<8x32xf32>
    %131 = math.tanh %130 : vector<8x32xf32>
    %132 = arith.mulf %127, %131 : vector<8x32xf32>
    %133 = arith.index_cast %112 : i32 to index
    %c0_40 = arith.constant 0 : index
    %134 = vector.load %arg16[%133, %c0_40] : memref<64x32xf32, #tpu.memory_space<vmem>>, vector<8x32xf32>
    tpu.vector_store %arg16[%133, %c0_40], %132 {strides = array<i32>} : memref<64x32xf32, #tpu.memory_space<vmem>>, vector<8x32xf32>,
    %c5_i32 = arith.constant 5 : i32
    %c8_i32_41 = arith.constant 8 : i32
    %135 = arith.muli %c5_i32, %c8_i32_41 : i32
    %136 = tpu.assume_multiple %135, 8 : i32
    %137 = arith.index_cast %136 : i32 to index
    %c0_42 = arith.constant 0 : index
    %138 = vector.load %arg15[%137, %c0_42] : memref<64x128xf32, #tpu.memory_space<vmem>>, vector<8x128xf32>
    %139 = arith.truncf %132 : vector<8x32xf32> to vector<8x32xbf16>
    %cst_43 = arith.constant dense<0.000000e+00> : vector<8x128xf32>
    %140 = tpu.matmul %139, %10, %cst_43 {dimension_numbers = #tpu.dot_dimension_numbers<[1], [0], [0], [1], [0, 0, 1, 1], [], []>} : vector<8x32xbf16>, vector<32x128xbf16>, vector<8x128xf32> -> vector<8x128xf32>
    %141 = arith.addf %138, %140 : vector<8x128xf32>
    %142 = arith.negf %141 : vector<8x128xf32>
    %143 = math.exp %142 : vector<8x128xf32>
    %cst_44 = arith.constant 1.000000e+00 : f32
    %144 = vector.broadcast %cst_44 : f32 to vector<8x128xf32>
    %145 = arith.addf %144, %143 : vector<8x128xf32>
    %146 = arith.divf %144, %145 : vector<8x128xf32>
    %147 = math.tanh %141 : vector<8x128xf32>
    %148 = vector.extract_strided_slice %146 {offsets = [0, 0], sizes = [8, 32], strides = [1, 1]} : vector<8x128xf32> to vector<8x32xf32>
    %149 = vector.extract_strided_slice %146 {offsets = [0, 32], sizes = [8, 32], strides = [1, 1]} : vector<8x128xf32> to vector<8x32xf32>
    %150 = vector.extract_strided_slice %147 {offsets = [0, 64], sizes = [8, 32], strides = [1, 1]} : vector<8x128xf32> to vector<8x32xf32>
    %151 = vector.extract_strided_slice %146 {offsets = [0, 96], sizes = [8, 32], strides = [1, 1]} : vector<8x128xf32> to vector<8x32xf32>
    %152 = arith.mulf %149, %130 : vector<8x32xf32>
    %153 = arith.mulf %148, %150 : vector<8x32xf32>
    %154 = arith.addf %152, %153 : vector<8x32xf32>
    %155 = math.tanh %154 : vector<8x32xf32>
    %156 = arith.mulf %151, %155 : vector<8x32xf32>
    %157 = arith.index_cast %136 : i32 to index
    %c0_45 = arith.constant 0 : index
    %158 = vector.load %arg16[%157, %c0_45] : memref<64x32xf32, #tpu.memory_space<vmem>>, vector<8x32xf32>
    tpu.vector_store %arg16[%157, %c0_45], %156 {strides = array<i32>} : memref<64x32xf32, #tpu.memory_space<vmem>>, vector<8x32xf32>,
    %c6_i32 = arith.constant 6 : i32
    %c8_i32_46 = arith.constant 8 : i32
    %159 = arith.muli %c6_i32, %c8_i32_46 : i32
    %160 = tpu.assume_multiple %159, 8 : i32
    %161 = arith.index_cast %160 : i32 to index
    %c0_47 = arith.constant 0 : index
    %162 = vector.load %arg15[%161, %c0_47] : memref<64x128xf32, #tpu.memory_space<vmem>>, vector<8x128xf32>
    %163 = arith.truncf %156 : vector<8x32xf32> to vector<8x32xbf16>
    %cst_48 = arith.constant dense<0.000000e+00> : vector<8x128xf32>
    %164 = tpu.matmul %163, %10, %cst_48 {dimension_numbers = #tpu.dot_dimension_numbers<[1], [0], [0], [1], [0, 0, 1, 1], [], []>} : vector<8x32xbf16>, vector<32x128xbf16>, vector<8x128xf32> -> vector<8x128xf32>
    %165 = arith.addf %162, %164 : vector<8x128xf32>
    %166 = arith.negf %165 : vector<8x128xf32>
    %167 = math.exp %166 : vector<8x128xf32>
    %cst_49 = arith.constant 1.000000e+00 : f32
    %168 = vector.broadcast %cst_49 : f32 to vector<8x128xf32>
    %169 = arith.addf %168, %167 : vector<8x128xf32>
    %170 = arith.divf %168, %169 : vector<8x128xf32>
    %171 = math.tanh %165 : vector<8x128xf32>
    %172 = vector.extract_strided_slice %170 {offsets = [0, 0], sizes = [8, 32], strides = [1, 1]} : vector<8x128xf32> to vector<8x32xf32>
    %173 = vector.extract_strided_slice %170 {offsets = [0, 32], sizes = [8, 32], strides = [1, 1]} : vector<8x128xf32> to vector<8x32xf32>
    %174 = vector.extract_strided_slice %171 {offsets = [0, 64], sizes = [8, 32], strides = [1, 1]} : vector<8x128xf32> to vector<8x32xf32>
    %175 = vector.extract_strided_slice %170 {offsets = [0, 96], sizes = [8, 32], strides = [1, 1]} : vector<8x128xf32> to vector<8x32xf32>
    %176 = arith.mulf %173, %154 : vector<8x32xf32>
    %177 = arith.mulf %172, %174 : vector<8x32xf32>
    %178 = arith.addf %176, %177 : vector<8x32xf32>
    %179 = math.tanh %178 : vector<8x32xf32>
    %180 = arith.mulf %175, %179 : vector<8x32xf32>
    %181 = arith.index_cast %160 : i32 to index
    %c0_50 = arith.constant 0 : index
    %182 = vector.load %arg16[%181, %c0_50] : memref<64x32xf32, #tpu.memory_space<vmem>>, vector<8x32xf32>
    tpu.vector_store %arg16[%181, %c0_50], %180 {strides = array<i32>} : memref<64x32xf32, #tpu.memory_space<vmem>>, vector<8x32xf32>,
    %c7_i32 = arith.constant 7 : i32
    %c8_i32_51 = arith.constant 8 : i32
    %183 = arith.muli %c7_i32, %c8_i32_51 : i32
    %184 = tpu.assume_multiple %183, 8 : i32
    %185 = arith.index_cast %184 : i32 to index
    %c0_52 = arith.constant 0 : index
    %186 = vector.load %arg15[%185, %c0_52] : memref<64x128xf32, #tpu.memory_space<vmem>>, vector<8x128xf32>
    %187 = arith.truncf %180 : vector<8x32xf32> to vector<8x32xbf16>
    %cst_53 = arith.constant dense<0.000000e+00> : vector<8x128xf32>
    %188 = tpu.matmul %187, %10, %cst_53 {dimension_numbers = #tpu.dot_dimension_numbers<[1], [0], [0], [1], [0, 0, 1, 1], [], []>} : vector<8x32xbf16>, vector<32x128xbf16>, vector<8x128xf32> -> vector<8x128xf32>
    %189 = arith.addf %186, %188 : vector<8x128xf32>
    %190 = arith.negf %189 : vector<8x128xf32>
    %191 = math.exp %190 : vector<8x128xf32>
    %cst_54 = arith.constant 1.000000e+00 : f32
    %192 = vector.broadcast %cst_54 : f32 to vector<8x128xf32>
    %193 = arith.addf %192, %191 : vector<8x128xf32>
    %194 = arith.divf %192, %193 : vector<8x128xf32>
    %195 = math.tanh %189 : vector<8x128xf32>
    %196 = vector.extract_strided_slice %194 {offsets = [0, 0], sizes = [8, 32], strides = [1, 1]} : vector<8x128xf32> to vector<8x32xf32>
    %197 = vector.extract_strided_slice %194 {offsets = [0, 32], sizes = [8, 32], strides = [1, 1]} : vector<8x128xf32> to vector<8x32xf32>
    %198 = vector.extract_strided_slice %195 {offsets = [0, 64], sizes = [8, 32], strides = [1, 1]} : vector<8x128xf32> to vector<8x32xf32>
    %199 = vector.extract_strided_slice %194 {offsets = [0, 96], sizes = [8, 32], strides = [1, 1]} : vector<8x128xf32> to vector<8x32xf32>
    %200 = arith.mulf %197, %178 : vector<8x32xf32>
    %201 = arith.mulf %196, %198 : vector<8x32xf32>
    %202 = arith.addf %200, %201 : vector<8x32xf32>
    %203 = math.tanh %202 : vector<8x32xf32>
    %204 = arith.mulf %199, %203 : vector<8x32xf32>
    %205 = arith.index_cast %184 : i32 to index
    %c0_55 = arith.constant 0 : index
    %206 = vector.load %arg16[%205, %c0_55] : memref<64x32xf32, #tpu.memory_space<vmem>>, vector<8x32xf32>
    tpu.vector_store %arg16[%205, %c0_55], %204 {strides = array<i32>} : memref<64x32xf32, #tpu.memory_space<vmem>>, vector<8x32xf32>,
    %c8_i32_56 = arith.constant 8 : i32
    %c0_57 = arith.constant 0 : index
    %c0_58 = arith.constant 0 : index
    %c0_59 = arith.constant 0 : index
    %207 = vector.load %arg13[%c0_57, %c0_58, %c0_59] : memref<2x8x32xf32, #tpu.memory_space<vmem>>, vector<1x8x32xf32>
    %208 = vector.shape_cast %207 : vector<1x8x32xf32> to vector<8x32xf32>
    %209 = vector.shape_cast %204 : vector<8x32xf32> to vector<1x8x32xf32>
    tpu.vector_store %arg13[%c0_57, %c0_58, %c0_59], %209 {strides = array<i32>} : memref<2x8x32xf32, #tpu.memory_space<vmem>>, vector<1x8x32xf32>,
    %c0_60 = arith.constant 0 : index
    %c0_61 = arith.constant 0 : index
    %c0_62 = arith.constant 0 : index
    %210 = vector.load %arg14[%c0_60, %c0_61, %c0_62] : memref<2x8x32xf32, #tpu.memory_space<vmem>>, vector<1x8x32xf32>
    %211 = vector.shape_cast %210 : vector<1x8x32xf32> to vector<8x32xf32>
    %212 = vector.shape_cast %202 : vector<8x32xf32> to vector<1x8x32xf32>
    tpu.vector_store %arg14[%c0_60, %c0_61, %c0_62], %212 {strides = array<i32>} : memref<2x8x32xf32, #tpu.memory_space<vmem>>, vector<1x8x32xf32>,
    %c0_63 = arith.constant 0 : index
    %c0_64 = arith.constant 0 : index
    %213 = vector.load %arg16[%c0_63, %c0_64] : memref<64x32xf32, #tpu.memory_space<vmem>>, vector<64x32xf32>
    %214 = arith.truncf %213 : vector<64x32xf32> to vector<64x32xbf16>
    %c0_65 = arith.constant 0 : index
    %c0_66 = arith.constant 0 : index
    %215 = vector.load %arg5[%c0_65, %c0_66] : memref<32x128xbf16, #tpu.memory_space<vmem>>, vector<32x128xbf16>
    %cst_67 = arith.constant dense<0.000000e+00> : vector<64x128xf32>
    %216 = tpu.matmul %214, %215, %cst_67 {dimension_numbers = #tpu.dot_dimension_numbers<[1], [0], [0], [1], [0, 0, 1, 1], [], []>} : vector<64x32xbf16>, vector<32x128xbf16>, vector<64x128xf32> -> vector<64x128xf32>
    %c0_68 = arith.constant 0 : index
    %c0_69 = arith.constant 0 : index
    %217 = vector.load %arg7[%c0_68, %c0_69] : memref<1x128xf32, #tpu.memory_space<vmem>>, vector<1x128xf32>
    %218 = vector.broadcast %217 : vector<1x128xf32> to vector<64x128xf32>
    %219 = arith.addf %216, %218 : vector<64x128xf32>
    %c0_70 = arith.constant 0 : index
    %c0_71 = arith.constant 0 : index
    %220 = vector.load %arg15[%c0_70, %c0_71] : memref<64x128xf32, #tpu.memory_space<vmem>>, vector<64x128xf32>
    tpu.vector_store %arg15[%c0_70, %c0_71], %219 {strides = array<i32>} : memref<64x128xf32, #tpu.memory_space<vmem>>, vector<64x128xf32>,
    %c0_72 = arith.constant 0 : index
    %c0_73 = arith.constant 0 : index
    %221 = vector.load %arg6[%c0_72, %c0_73] : memref<32x128xbf16, #tpu.memory_space<vmem>>, vector<32x128xbf16>
    %c1 = arith.constant 1 : index
    %c0_74 = arith.constant 0 : index
    %c0_75 = arith.constant 0 : index
    %222 = vector.load %arg13[%c1, %c0_74, %c0_75] : memref<2x8x32xf32, #tpu.memory_space<vmem>>, vector<1x8x32xf32>
    %223 = vector.shape_cast %222 : vector<1x8x32xf32> to vector<8x32xf32>
    %c1_76 = arith.constant 1 : index
    %c0_77 = arith.constant 0 : index
    %c0_78 = arith.constant 0 : index
    %224 = vector.load %arg14[%c1_76, %c0_77, %c0_78] : memref<2x8x32xf32, #tpu.memory_space<vmem>>, vector<1x8x32xf32>
    %225 = vector.shape_cast %224 : vector<1x8x32xf32> to vector<8x32xf32>
    %c0_i32_79 = arith.constant 0 : i32
    %c8_i32_80 = arith.constant 8 : i32
    %226 = arith.muli %c0_i32_79, %c8_i32_80 : i32
    %227 = tpu.assume_multiple %226, 8 : i32
    %228 = arith.index_cast %227 : i32 to index
    %c0_81 = arith.constant 0 : index
    %229 = vector.load %arg15[%228, %c0_81] : memref<64x128xf32, #tpu.memory_space<vmem>>, vector<8x128xf32>
    %230 = arith.truncf %223 : vector<8x32xf32> to vector<8x32xbf16>
    %cst_82 = arith.constant dense<0.000000e+00> : vector<8x128xf32>
    %231 = tpu.matmul %230, %221, %cst_82 {dimension_numbers = #tpu.dot_dimension_numbers<[1], [0], [0], [1], [0, 0, 1, 1], [], []>} : vector<8x32xbf16>, vector<32x128xbf16>, vector<8x128xf32> -> vector<8x128xf32>
    %232 = arith.addf %229, %231 : vector<8x128xf32>
    %233 = arith.negf %232 : vector<8x128xf32>
    %234 = math.exp %233 : vector<8x128xf32>
    %cst_83 = arith.constant 1.000000e+00 : f32
    %235 = vector.broadcast %cst_83 : f32 to vector<8x128xf32>
    %236 = arith.addf %235, %234 : vector<8x128xf32>
    %237 = arith.divf %235, %236 : vector<8x128xf32>
    %238 = math.tanh %232 : vector<8x128xf32>
    %239 = vector.extract_strided_slice %237 {offsets = [0, 0], sizes = [8, 32], strides = [1, 1]} : vector<8x128xf32> to vector<8x32xf32>
    %240 = vector.extract_strided_slice %237 {offsets = [0, 32], sizes = [8, 32], strides = [1, 1]} : vector<8x128xf32> to vector<8x32xf32>
    %241 = vector.extract_strided_slice %238 {offsets = [0, 64], sizes = [8, 32], strides = [1, 1]} : vector<8x128xf32> to vector<8x32xf32>
    %242 = vector.extract_strided_slice %237 {offsets = [0, 96], sizes = [8, 32], strides = [1, 1]} : vector<8x128xf32> to vector<8x32xf32>
    %243 = arith.mulf %240, %225 : vector<8x32xf32>
    %244 = arith.mulf %239, %241 : vector<8x32xf32>
    %245 = arith.addf %243, %244 : vector<8x32xf32>
    %246 = math.tanh %245 : vector<8x32xf32>
    %247 = arith.mulf %242, %246 : vector<8x32xf32>
    %248 = arith.index_cast %227 : i32 to index
    %c0_84 = arith.constant 0 : index
    %249 = vector.load %arg16[%248, %c0_84] : memref<64x32xf32, #tpu.memory_space<vmem>>, vector<8x32xf32>
    tpu.vector_store %arg16[%248, %c0_84], %247 {strides = array<i32>} : memref<64x32xf32, #tpu.memory_space<vmem>>, vector<8x32xf32>,
    %c1_i32_85 = arith.constant 1 : i32
    %c8_i32_86 = arith.constant 8 : i32
    %250 = arith.muli %c1_i32_85, %c8_i32_86 : i32
    %251 = tpu.assume_multiple %250, 8 : i32
    %252 = arith.index_cast %251 : i32 to index
    %c0_87 = arith.constant 0 : index
    %253 = vector.load %arg15[%252, %c0_87] : memref<64x128xf32, #tpu.memory_space<vmem>>, vector<8x128xf32>
    %254 = arith.truncf %247 : vector<8x32xf32> to vector<8x32xbf16>
    %cst_88 = arith.constant dense<0.000000e+00> : vector<8x128xf32>
    %255 = tpu.matmul %254, %221, %cst_88 {dimension_numbers = #tpu.dot_dimension_numbers<[1], [0], [0], [1], [0, 0, 1, 1], [], []>} : vector<8x32xbf16>, vector<32x128xbf16>, vector<8x128xf32> -> vector<8x128xf32>
    %256 = arith.addf %253, %255 : vector<8x128xf32>
    %257 = arith.negf %256 : vector<8x128xf32>
    %258 = math.exp %257 : vector<8x128xf32>
    %cst_89 = arith.constant 1.000000e+00 : f32
    %259 = vector.broadcast %cst_89 : f32 to vector<8x128xf32>
    %260 = arith.addf %259, %258 : vector<8x128xf32>
    %261 = arith.divf %259, %260 : vector<8x128xf32>
    %262 = math.tanh %256 : vector<8x128xf32>
    %263 = vector.extract_strided_slice %261 {offsets = [0, 0], sizes = [8, 32], strides = [1, 1]} : vector<8x128xf32> to vector<8x32xf32>
    %264 = vector.extract_strided_slice %261 {offsets = [0, 32], sizes = [8, 32], strides = [1, 1]} : vector<8x128xf32> to vector<8x32xf32>
    %265 = vector.extract_strided_slice %262 {offsets = [0, 64], sizes = [8, 32], strides = [1, 1]} : vector<8x128xf32> to vector<8x32xf32>
    %266 = vector.extract_strided_slice %261 {offsets = [0, 96], sizes = [8, 32], strides = [1, 1]} : vector<8x128xf32> to vector<8x32xf32>
    %267 = arith.mulf %264, %245 : vector<8x32xf32>
    %268 = arith.mulf %263, %265 : vector<8x32xf32>
    %269 = arith.addf %267, %268 : vector<8x32xf32>
    %270 = math.tanh %269 : vector<8x32xf32>
    %271 = arith.mulf %266, %270 : vector<8x32xf32>
    %272 = arith.index_cast %251 : i32 to index
    %c0_90 = arith.constant 0 : index
    %273 = vector.load %arg16[%272, %c0_90] : memref<64x32xf32, #tpu.memory_space<vmem>>, vector<8x32xf32>
    tpu.vector_store %arg16[%272, %c0_90], %271 {strides = array<i32>} : memref<64x32xf32, #tpu.memory_space<vmem>>, vector<8x32xf32>,
    %c2_i32_91 = arith.constant 2 : i32
    %c8_i32_92 = arith.constant 8 : i32
    %274 = arith.muli %c2_i32_91, %c8_i32_92 : i32
    %275 = tpu.assume_multiple %274, 8 : i32
    %276 = arith.index_cast %275 : i32 to index
    %c0_93 = arith.constant 0 : index
    %277 = vector.load %arg15[%276, %c0_93] : memref<64x128xf32, #tpu.memory_space<vmem>>, vector<8x128xf32>
    %278 = arith.truncf %271 : vector<8x32xf32> to vector<8x32xbf16>
    %cst_94 = arith.constant dense<0.000000e+00> : vector<8x128xf32>
    %279 = tpu.matmul %278, %221, %cst_94 {dimension_numbers = #tpu.dot_dimension_numbers<[1], [0], [0], [1], [0, 0, 1, 1], [], []>} : vector<8x32xbf16>, vector<32x128xbf16>, vector<8x128xf32> -> vector<8x128xf32>
    %280 = arith.addf %277, %279 : vector<8x128xf32>
    %281 = arith.negf %280 : vector<8x128xf32>
    %282 = math.exp %281 : vector<8x128xf32>
    %cst_95 = arith.constant 1.000000e+00 : f32
    %283 = vector.broadcast %cst_95 : f32 to vector<8x128xf32>
    %284 = arith.addf %283, %282 : vector<8x128xf32>
    %285 = arith.divf %283, %284 : vector<8x128xf32>
    %286 = math.tanh %280 : vector<8x128xf32>
    %287 = vector.extract_strided_slice %285 {offsets = [0, 0], sizes = [8, 32], strides = [1, 1]} : vector<8x128xf32> to vector<8x32xf32>
    %288 = vector.extract_strided_slice %285 {offsets = [0, 32], sizes = [8, 32], strides = [1, 1]} : vector<8x128xf32> to vector<8x32xf32>
    %289 = vector.extract_strided_slice %286 {offsets = [0, 64], sizes = [8, 32], strides = [1, 1]} : vector<8x128xf32> to vector<8x32xf32>
    %290 = vector.extract_strided_slice %285 {offsets = [0, 96], sizes = [8, 32], strides = [1, 1]} : vector<8x128xf32> to vector<8x32xf32>
    %291 = arith.mulf %288, %269 : vector<8x32xf32>
    %292 = arith.mulf %287, %289 : vector<8x32xf32>
    %293 = arith.addf %291, %292 : vector<8x32xf32>
    %294 = math.tanh %293 : vector<8x32xf32>
    %295 = arith.mulf %290, %294 : vector<8x32xf32>
    %296 = arith.index_cast %275 : i32 to index
    %c0_96 = arith.constant 0 : index
    %297 = vector.load %arg16[%296, %c0_96] : memref<64x32xf32, #tpu.memory_space<vmem>>, vector<8x32xf32>
    tpu.vector_store %arg16[%296, %c0_96], %295 {strides = array<i32>} : memref<64x32xf32, #tpu.memory_space<vmem>>, vector<8x32xf32>,
    %c3_i32_97 = arith.constant 3 : i32
    %c8_i32_98 = arith.constant 8 : i32
    %298 = arith.muli %c3_i32_97, %c8_i32_98 : i32
    %299 = tpu.assume_multiple %298, 8 : i32
    %300 = arith.index_cast %299 : i32 to index
    %c0_99 = arith.constant 0 : index
    %301 = vector.load %arg15[%300, %c0_99] : memref<64x128xf32, #tpu.memory_space<vmem>>, vector<8x128xf32>
    %302 = arith.truncf %295 : vector<8x32xf32> to vector<8x32xbf16>
    %cst_100 = arith.constant dense<0.000000e+00> : vector<8x128xf32>
    %303 = tpu.matmul %302, %221, %cst_100 {dimension_numbers = #tpu.dot_dimension_numbers<[1], [0], [0], [1], [0, 0, 1, 1], [], []>} : vector<8x32xbf16>, vector<32x128xbf16>, vector<8x128xf32> -> vector<8x128xf32>
    %304 = arith.addf %301, %303 : vector<8x128xf32>
    %305 = arith.negf %304 : vector<8x128xf32>
    %306 = math.exp %305 : vector<8x128xf32>
    %cst_101 = arith.constant 1.000000e+00 : f32
    %307 = vector.broadcast %cst_101 : f32 to vector<8x128xf32>
    %308 = arith.addf %307, %306 : vector<8x128xf32>
    %309 = arith.divf %307, %308 : vector<8x128xf32>
    %310 = math.tanh %304 : vector<8x128xf32>
    %311 = vector.extract_strided_slice %309 {offsets = [0, 0], sizes = [8, 32], strides = [1, 1]} : vector<8x128xf32> to vector<8x32xf32>
    %312 = vector.extract_strided_slice %309 {offsets = [0, 32], sizes = [8, 32], strides = [1, 1]} : vector<8x128xf32> to vector<8x32xf32>
    %313 = vector.extract_strided_slice %310 {offsets = [0, 64], sizes = [8, 32], strides = [1, 1]} : vector<8x128xf32> to vector<8x32xf32>
    %314 = vector.extract_strided_slice %309 {offsets = [0, 96], sizes = [8, 32], strides = [1, 1]} : vector<8x128xf32> to vector<8x32xf32>
    %315 = arith.mulf %312, %293 : vector<8x32xf32>
    %316 = arith.mulf %311, %313 : vector<8x32xf32>
    %317 = arith.addf %315, %316 : vector<8x32xf32>
    %318 = math.tanh %317 : vector<8x32xf32>
    %319 = arith.mulf %314, %318 : vector<8x32xf32>
    %320 = arith.index_cast %299 : i32 to index
    %c0_102 = arith.constant 0 : index
    %321 = vector.load %arg16[%320, %c0_102] : memref<64x32xf32, #tpu.memory_space<vmem>>, vector<8x32xf32>
    tpu.vector_store %arg16[%320, %c0_102], %319 {strides = array<i32>} : memref<64x32xf32, #tpu.memory_space<vmem>>, vector<8x32xf32>,
    %c4_i32_103 = arith.constant 4 : i32
    %c8_i32_104 = arith.constant 8 : i32
    %322 = arith.muli %c4_i32_103, %c8_i32_104 : i32
    %323 = tpu.assume_multiple %322, 8 : i32
    %324 = arith.index_cast %323 : i32 to index
    %c0_105 = arith.constant 0 : index
    %325 = vector.load %arg15[%324, %c0_105] : memref<64x128xf32, #tpu.memory_space<vmem>>, vector<8x128xf32>
    %326 = arith.truncf %319 : vector<8x32xf32> to vector<8x32xbf16>
    %cst_106 = arith.constant dense<0.000000e+00> : vector<8x128xf32>
    %327 = tpu.matmul %326, %221, %cst_106 {dimension_numbers = #tpu.dot_dimension_numbers<[1], [0], [0], [1], [0, 0, 1, 1], [], []>} : vector<8x32xbf16>, vector<32x128xbf16>, vector<8x128xf32> -> vector<8x128xf32>
    %328 = arith.addf %325, %327 : vector<8x128xf32>
    %329 = arith.negf %328 : vector<8x128xf32>
    %330 = math.exp %329 : vector<8x128xf32>
    %cst_107 = arith.constant 1.000000e+00 : f32
    %331 = vector.broadcast %cst_107 : f32 to vector<8x128xf32>
    %332 = arith.addf %331, %330 : vector<8x128xf32>
    %333 = arith.divf %331, %332 : vector<8x128xf32>
    %334 = math.tanh %328 : vector<8x128xf32>
    %335 = vector.extract_strided_slice %333 {offsets = [0, 0], sizes = [8, 32], strides = [1, 1]} : vector<8x128xf32> to vector<8x32xf32>
    %336 = vector.extract_strided_slice %333 {offsets = [0, 32], sizes = [8, 32], strides = [1, 1]} : vector<8x128xf32> to vector<8x32xf32>
    %337 = vector.extract_strided_slice %334 {offsets = [0, 64], sizes = [8, 32], strides = [1, 1]} : vector<8x128xf32> to vector<8x32xf32>
    %338 = vector.extract_strided_slice %333 {offsets = [0, 96], sizes = [8, 32], strides = [1, 1]} : vector<8x128xf32> to vector<8x32xf32>
    %339 = arith.mulf %336, %317 : vector<8x32xf32>
    %340 = arith.mulf %335, %337 : vector<8x32xf32>
    %341 = arith.addf %339, %340 : vector<8x32xf32>
    %342 = math.tanh %341 : vector<8x32xf32>
    %343 = arith.mulf %338, %342 : vector<8x32xf32>
    %344 = arith.index_cast %323 : i32 to index
    %c0_108 = arith.constant 0 : index
    %345 = vector.load %arg16[%344, %c0_108] : memref<64x32xf32, #tpu.memory_space<vmem>>, vector<8x32xf32>
    tpu.vector_store %arg16[%344, %c0_108], %343 {strides = array<i32>} : memref<64x32xf32, #tpu.memory_space<vmem>>, vector<8x32xf32>,
    %c5_i32_109 = arith.constant 5 : i32
    %c8_i32_110 = arith.constant 8 : i32
    %346 = arith.muli %c5_i32_109, %c8_i32_110 : i32
    %347 = tpu.assume_multiple %346, 8 : i32
    %348 = arith.index_cast %347 : i32 to index
    %c0_111 = arith.constant 0 : index
    %349 = vector.load %arg15[%348, %c0_111] : memref<64x128xf32, #tpu.memory_space<vmem>>, vector<8x128xf32>
    %350 = arith.truncf %343 : vector<8x32xf32> to vector<8x32xbf16>
    %cst_112 = arith.constant dense<0.000000e+00> : vector<8x128xf32>
    %351 = tpu.matmul %350, %221, %cst_112 {dimension_numbers = #tpu.dot_dimension_numbers<[1], [0], [0], [1], [0, 0, 1, 1], [], []>} : vector<8x32xbf16>, vector<32x128xbf16>, vector<8x128xf32> -> vector<8x128xf32>
    %352 = arith.addf %349, %351 : vector<8x128xf32>
    %353 = arith.negf %352 : vector<8x128xf32>
    %354 = math.exp %353 : vector<8x128xf32>
    %cst_113 = arith.constant 1.000000e+00 : f32
    %355 = vector.broadcast %cst_113 : f32 to vector<8x128xf32>
    %356 = arith.addf %355, %354 : vector<8x128xf32>
    %357 = arith.divf %355, %356 : vector<8x128xf32>
    %358 = math.tanh %352 : vector<8x128xf32>
    %359 = vector.extract_strided_slice %357 {offsets = [0, 0], sizes = [8, 32], strides = [1, 1]} : vector<8x128xf32> to vector<8x32xf32>
    %360 = vector.extract_strided_slice %357 {offsets = [0, 32], sizes = [8, 32], strides = [1, 1]} : vector<8x128xf32> to vector<8x32xf32>
    %361 = vector.extract_strided_slice %358 {offsets = [0, 64], sizes = [8, 32], strides = [1, 1]} : vector<8x128xf32> to vector<8x32xf32>
    %362 = vector.extract_strided_slice %357 {offsets = [0, 96], sizes = [8, 32], strides = [1, 1]} : vector<8x128xf32> to vector<8x32xf32>
    %363 = arith.mulf %360, %341 : vector<8x32xf32>
    %364 = arith.mulf %359, %361 : vector<8x32xf32>
    %365 = arith.addf %363, %364 : vector<8x32xf32>
    %366 = math.tanh %365 : vector<8x32xf32>
    %367 = arith.mulf %362, %366 : vector<8x32xf32>
    %368 = arith.index_cast %347 : i32 to index
    %c0_114 = arith.constant 0 : index
    %369 = vector.load %arg16[%368, %c0_114] : memref<64x32xf32, #tpu.memory_space<vmem>>, vector<8x32xf32>
    tpu.vector_store %arg16[%368, %c0_114], %367 {strides = array<i32>} : memref<64x32xf32, #tpu.memory_space<vmem>>, vector<8x32xf32>,
    %c6_i32_115 = arith.constant 6 : i32
    %c8_i32_116 = arith.constant 8 : i32
    %370 = arith.muli %c6_i32_115, %c8_i32_116 : i32
    %371 = tpu.assume_multiple %370, 8 : i32
    %372 = arith.index_cast %371 : i32 to index
    %c0_117 = arith.constant 0 : index
    %373 = vector.load %arg15[%372, %c0_117] : memref<64x128xf32, #tpu.memory_space<vmem>>, vector<8x128xf32>
    %374 = arith.truncf %367 : vector<8x32xf32> to vector<8x32xbf16>
    %cst_118 = arith.constant dense<0.000000e+00> : vector<8x128xf32>
    %375 = tpu.matmul %374, %221, %cst_118 {dimension_numbers = #tpu.dot_dimension_numbers<[1], [0], [0], [1], [0, 0, 1, 1], [], []>} : vector<8x32xbf16>, vector<32x128xbf16>, vector<8x128xf32> -> vector<8x128xf32>
    %376 = arith.addf %373, %375 : vector<8x128xf32>
    %377 = arith.negf %376 : vector<8x128xf32>
    %378 = math.exp %377 : vector<8x128xf32>
    %cst_119 = arith.constant 1.000000e+00 : f32
    %379 = vector.broadcast %cst_119 : f32 to vector<8x128xf32>
    %380 = arith.addf %379, %378 : vector<8x128xf32>
    %381 = arith.divf %379, %380 : vector<8x128xf32>
    %382 = math.tanh %376 : vector<8x128xf32>
    %383 = vector.extract_strided_slice %381 {offsets = [0, 0], sizes = [8, 32], strides = [1, 1]} : vector<8x128xf32> to vector<8x32xf32>
    %384 = vector.extract_strided_slice %381 {offsets = [0, 32], sizes = [8, 32], strides = [1, 1]} : vector<8x128xf32> to vector<8x32xf32>
    %385 = vector.extract_strided_slice %382 {offsets = [0, 64], sizes = [8, 32], strides = [1, 1]} : vector<8x128xf32> to vector<8x32xf32>
    %386 = vector.extract_strided_slice %381 {offsets = [0, 96], sizes = [8, 32], strides = [1, 1]} : vector<8x128xf32> to vector<8x32xf32>
    %387 = arith.mulf %384, %365 : vector<8x32xf32>
    %388 = arith.mulf %383, %385 : vector<8x32xf32>
    %389 = arith.addf %387, %388 : vector<8x32xf32>
    %390 = math.tanh %389 : vector<8x32xf32>
    %391 = arith.mulf %386, %390 : vector<8x32xf32>
    %392 = arith.index_cast %371 : i32 to index
    %c0_120 = arith.constant 0 : index
    %393 = vector.load %arg16[%392, %c0_120] : memref<64x32xf32, #tpu.memory_space<vmem>>, vector<8x32xf32>
    tpu.vector_store %arg16[%392, %c0_120], %391 {strides = array<i32>} : memref<64x32xf32, #tpu.memory_space<vmem>>, vector<8x32xf32>,
    %c7_i32_121 = arith.constant 7 : i32
    %c8_i32_122 = arith.constant 8 : i32
    %394 = arith.muli %c7_i32_121, %c8_i32_122 : i32
    %395 = tpu.assume_multiple %394, 8 : i32
    %396 = arith.index_cast %395 : i32 to index
    %c0_123 = arith.constant 0 : index
    %397 = vector.load %arg15[%396, %c0_123] : memref<64x128xf32, #tpu.memory_space<vmem>>, vector<8x128xf32>
    %398 = arith.truncf %391 : vector<8x32xf32> to vector<8x32xbf16>
    %cst_124 = arith.constant dense<0.000000e+00> : vector<8x128xf32>
    %399 = tpu.matmul %398, %221, %cst_124 {dimension_numbers = #tpu.dot_dimension_numbers<[1], [0], [0], [1], [0, 0, 1, 1], [], []>} : vector<8x32xbf16>, vector<32x128xbf16>, vector<8x128xf32> -> vector<8x128xf32>
    %400 = arith.addf %397, %399 : vector<8x128xf32>
    %401 = arith.negf %400 : vector<8x128xf32>
    %402 = math.exp %401 : vector<8x128xf32>
    %cst_125 = arith.constant 1.000000e+00 : f32
    %403 = vector.broadcast %cst_125 : f32 to vector<8x128xf32>
    %404 = arith.addf %403, %402 : vector<8x128xf32>
    %405 = arith.divf %403, %404 : vector<8x128xf32>
    %406 = math.tanh %400 : vector<8x128xf32>
    %407 = vector.extract_strided_slice %405 {offsets = [0, 0], sizes = [8, 32], strides = [1, 1]} : vector<8x128xf32> to vector<8x32xf32>
    %408 = vector.extract_strided_slice %405 {offsets = [0, 32], sizes = [8, 32], strides = [1, 1]} : vector<8x128xf32> to vector<8x32xf32>
    %409 = vector.extract_strided_slice %406 {offsets = [0, 64], sizes = [8, 32], strides = [1, 1]} : vector<8x128xf32> to vector<8x32xf32>
    %410 = vector.extract_strided_slice %405 {offsets = [0, 96], sizes = [8, 32], strides = [1, 1]} : vector<8x128xf32> to vector<8x32xf32>
    %411 = arith.mulf %408, %389 : vector<8x32xf32>
    %412 = arith.mulf %407, %409 : vector<8x32xf32>
    %413 = arith.addf %411, %412 : vector<8x32xf32>
    %414 = math.tanh %413 : vector<8x32xf32>
    %415 = arith.mulf %410, %414 : vector<8x32xf32>
    %416 = arith.index_cast %395 : i32 to index
    %c0_126 = arith.constant 0 : index
    %417 = vector.load %arg16[%416, %c0_126] : memref<64x32xf32, #tpu.memory_space<vmem>>, vector<8x32xf32>
    tpu.vector_store %arg16[%416, %c0_126], %415 {strides = array<i32>} : memref<64x32xf32, #tpu.memory_space<vmem>>, vector<8x32xf32>,
    %c8_i32_127 = arith.constant 8 : i32
    %c1_128 = arith.constant 1 : index
    %c0_129 = arith.constant 0 : index
    %c0_130 = arith.constant 0 : index
    %418 = vector.load %arg13[%c1_128, %c0_129, %c0_130] : memref<2x8x32xf32, #tpu.memory_space<vmem>>, vector<1x8x32xf32>
    %419 = vector.shape_cast %418 : vector<1x8x32xf32> to vector<8x32xf32>
    %420 = vector.shape_cast %415 : vector<8x32xf32> to vector<1x8x32xf32>
    tpu.vector_store %arg13[%c1_128, %c0_129, %c0_130], %420 {strides = array<i32>} : memref<2x8x32xf32, #tpu.memory_space<vmem>>, vector<1x8x32xf32>,
    %c1_131 = arith.constant 1 : index
    %c0_132 = arith.constant 0 : index
    %c0_133 = arith.constant 0 : index
    %421 = vector.load %arg14[%c1_131, %c0_132, %c0_133] : memref<2x8x32xf32, #tpu.memory_space<vmem>>, vector<1x8x32xf32>
    %422 = vector.shape_cast %421 : vector<1x8x32xf32> to vector<8x32xf32>
    %423 = vector.shape_cast %413 : vector<8x32xf32> to vector<1x8x32xf32>
    tpu.vector_store %arg14[%c1_131, %c0_132, %c0_133], %423 {strides = array<i32>} : memref<2x8x32xf32, #tpu.memory_space<vmem>>, vector<1x8x32xf32>,
    %c0_134 = arith.constant 0 : index
    %c0_135 = arith.constant 0 : index
    %424 = vector.load %arg16[%c0_134, %c0_135] : memref<64x32xf32, #tpu.memory_space<vmem>>, vector<64x32xf32>
    %425 = arith.truncf %424 : vector<64x32xf32> to vector<64x32xbf16>
    %c0_136 = arith.constant 0 : index
    %c0_137 = arith.constant 0 : index
    %426 = vector.load %arg8[%c0_136, %c0_137] : memref<32x16xbf16, #tpu.memory_space<vmem>>, vector<32x16xbf16>
    %cst_138 = arith.constant dense<0.000000e+00> : vector<64x16xf32>
    %427 = tpu.matmul %425, %426, %cst_138 {dimension_numbers = #tpu.dot_dimension_numbers<[1], [0], [0], [1], [0, 0, 1, 1], [], []>} : vector<64x32xbf16>, vector<32x16xbf16>, vector<64x16xf32> -> vector<64x16xf32>
    %c0_139 = arith.constant 0 : index
    %c0_140 = arith.constant 0 : index
    %428 = vector.load %arg9[%c0_139, %c0_140] : memref<1x16xf32, #tpu.memory_space<vmem>>, vector<1x16xf32>
    %429 = vector.broadcast %428 : vector<1x16xf32> to vector<64x16xf32>
    %430 = arith.addf %427, %429 : vector<64x16xf32>
    %cst_141 = arith.constant 0.000000e+00 : f32
    %431 = vector.broadcast %cst_141 : f32 to vector<64x16xf32>
    %432 = arith.maximumf %430, %431 : vector<64x16xf32>
    %433 = arith.truncf %432 : vector<64x16xf32> to vector<64x16xbf16>
    %c0_142 = arith.constant 0 : index
    %c0_143 = arith.constant 0 : index
    %434 = vector.load %arg10[%c0_142, %c0_143] : memref<16x128xbf16, #tpu.memory_space<vmem>>, vector<16x128xbf16>
    %cst_144 = arith.constant dense<0.000000e+00> : vector<64x128xf32>
    %435 = tpu.matmul %433, %434, %cst_144 {dimension_numbers = #tpu.dot_dimension_numbers<[1], [0], [0], [1], [0, 0, 1, 1], [], []>} : vector<64x16xbf16>, vector<16x128xbf16>, vector<64x128xf32> -> vector<64x128xf32>
    %c0_145 = arith.constant 0 : index
    %c0_146 = arith.constant 0 : index
    %436 = vector.load %arg11[%c0_145, %c0_146] : memref<1x128xf32, #tpu.memory_space<vmem>>, vector<1x128xf32>
    %437 = vector.broadcast %436 : vector<1x128xf32> to vector<64x128xf32>
    %438 = arith.addf %435, %437 : vector<64x128xf32>
    %c0_147 = arith.constant 0 : index
    %c0_148 = arith.constant 0 : index
    %439 = vector.load %arg12[%c0_147, %c0_148] : memref<64x128xf32, #tpu.memory_space<vmem>>, vector<64x128xf32>
    tpu.vector_store %arg12[%c0_147, %c0_148], %438 {strides = array<i32>} : memref<64x128xf32, #tpu.memory_space<vmem>>, vector<64x128xf32>,
    return
  }
  func.func @transform_0(%arg0: i32) -> (i32, i32) {
    %c0_i32 = arith.constant 0 : i32
    %c0_i32_0 = arith.constant 0 : i32
    return %arg0, %c0_i32 : i32, i32
  }
  func.func @transform_1(%arg0: i32) -> (i32, i32) {
    %c0_i32 = arith.constant 0 : i32
    %c0_i32_0 = arith.constant 0 : i32
    %c0_i32_1 = arith.constant 0 : i32
    return %c0_i32, %c0_i32_0 : i32, i32
  }
  func.func @transform_2(%arg0: i32) -> (i32, i32) {
    %c0_i32 = arith.constant 0 : i32
    %c0_i32_0 = arith.constant 0 : i32
    %c0_i32_1 = arith.constant 0 : i32
    return %c0_i32, %c0_i32_0 : i32, i32
  }
  func.func @transform_3(%arg0: i32) -> (i32, i32) {
    %c0_i32 = arith.constant 0 : i32
    %c0_i32_0 = arith.constant 0 : i32
    %c0_i32_1 = arith.constant 0 : i32
    return %c0_i32, %c0_i32_0 : i32, i32
  }
  func.func @transform_4(%arg0: i32) -> (i32, i32) {
    %c0_i32 = arith.constant 0 : i32
    %c0_i32_0 = arith.constant 0 : i32
    %c0_i32_1 = arith.constant 0 : i32
    return %c0_i32, %c0_i32_0 : i32, i32
  }
  func.func @transform_5(%arg0: i32) -> (i32, i32) {
    %c0_i32 = arith.constant 0 : i32
    %c0_i32_0 = arith.constant 0 : i32
    %c0_i32_1 = arith.constant 0 : i32
    return %c0_i32, %c0_i32_0 : i32, i32
  }
  func.func @transform_6(%arg0: i32) -> (i32, i32) {
    %c0_i32 = arith.constant 0 : i32
    %c0_i32_0 = arith.constant 0 : i32
    %c0_i32_1 = arith.constant 0 : i32
    return %c0_i32, %c0_i32_0 : i32, i32
  }
  func.func @transform_7(%arg0: i32) -> (i32, i32) {
    %c0_i32 = arith.constant 0 : i32
    %c0_i32_0 = arith.constant 0 : i32
    %c0_i32_1 = arith.constant 0 : i32
    return %c0_i32, %c0_i32_0 : i32, i32
  }
  func.func @transform_8(%arg0: i32) -> (i32, i32) {
    %c0_i32 = arith.constant 0 : i32
    %c0_i32_0 = arith.constant 0 : i32
    %c0_i32_1 = arith.constant 0 : i32
    return %c0_i32, %c0_i32_0 : i32, i32
  }
  func.func @transform_9(%arg0: i32) -> (i32, i32) {
    %c0_i32 = arith.constant 0 : i32
    %c0_i32_0 = arith.constant 0 : i32
    %c0_i32_1 = arith.constant 0 : i32
    return %c0_i32, %c0_i32_0 : i32, i32
  }
  func.func @transform_10(%arg0: i32) -> (i32, i32) {
    %c0_i32 = arith.constant 0 : i32
    %c0_i32_0 = arith.constant 0 : i32
    %c0_i32_1 = arith.constant 0 : i32
    return %c0_i32, %c0_i32_0 : i32, i32
  }
  func.func @transform_11(%arg0: i32) -> (i32, i32) {
    %c0_i32 = arith.constant 0 : i32
    %c0_i32_0 = arith.constant 0 : i32
    return %arg0, %c0_i32 : i32, i32
  }
}

</mosaic_0001>

<llo_original>
// kernel: lstm_gru_rnn_forward.1
$region0: #{lstm_gru_rnn_forward.1}
  #allocation0 [shape = 'u32[]', space=smem, size = 0x4, offset = 0x4, fixed_abs, tag = 'smem constant byte address 0x4 - core index']
  #allocation1 [shape = 'u32[144,128]{1,0:T(1,128)}', space=vmem, size = 0x12000, scoped, tag = 'internal scratch']
  #allocation2 [shape = 'f32[2,8,32]{2,1,0:T(8,128)}', space=vmem, size = 0x2000, scoped, tag = 'scratch operand']
  #allocation3 [shape = 'f32[2,8,32]{2,1,0:T(8,128)}', space=vmem, size = 0x2000, scoped, tag = 'scratch operand']
  #allocation4 [shape = 'f32[64,128]{1,0:T(8,128)}', space=vmem, size = 0x8000, scoped, tag = 'scratch operand']
  #allocation5 [shape = 'f32[64,32]{1,0:T(8,128)}', space=vmem, size = 0x8000, scoped, tag = 'scratch operand']
  %s0 = inlined_call_operand.vmem [shape: bf16[64,16], index: 0, kind: input, shape index: {}]
  %s1 = inlined_call_operand.vmem [shape: bf16[16,128], index: 1, kind: input, shape index: {}]
  %s2 = inlined_call_operand.vmem [shape: bf16[32,128], index: 2, kind: input, shape index: {}]
  %s3 = inlined_call_operand.vmem [shape: f32[1,128], index: 3, kind: input, shape index: {}]
  %s4 = inlined_call_operand.vmem [shape: bf16[32,128], index: 4, kind: input, shape index: {}]
  %s5 = inlined_call_operand.vmem [shape: bf16[32,128], index: 5, kind: input, shape index: {}]
  %s6 = inlined_call_operand.vmem [shape: f32[1,128], index: 6, kind: input, shape index: {}]
  %s7 = inlined_call_operand.vmem [shape: bf16[32,16], index: 7, kind: input, shape index: {}]
  %s8 = inlined_call_operand.vmem [shape: f32[1,16], index: 8, kind: input, shape index: {}]
  %s9 = inlined_call_operand.vmem [shape: bf16[16,128], index: 9, kind: input, shape index: {}]
  %s10 = inlined_call_operand.vmem [shape: f32[1,128], index: 10, kind: input, shape index: {}]
  %s11 = inlined_call_operand.vmem [shape: f32[64,128], index: 11, kind: output, shape index: {}]
  %s12 = sld [smem:[#allocation0]]
  $region58: #{lstm_gru_rnn_forward.1} parent=0
    _
  %s14 = ssub.s32 1, %s12
  %s15 = scalar_select 0, %s14, %s12
  // Predicated region
  $region2: #{lstm_gru_rnn_forward.1} parent=0 // pred_check
    _
  $region3: #{lstm_gru_rnn_forward.1} parent=0 // pred_check_branch
    %17 = sbr.rel (0) target = $region5
  $region4: #{lstm_gru_rnn_forward.1} parent=0 // pred_region
    _
  $region5: #{lstm_gru_rnn_forward.1} parent=0 // pred_fallthru
    _
  // Predicated region
  $region6: #{lstm_gru_rnn_forward.1} parent=0 // pred_check
    _
  $region7: #{lstm_gru_rnn_forward.1} parent=0 // pred_check_branch
    %19 = sbr.rel (0) target = $region9
  $region8: #{lstm_gru_rnn_forward.1} parent=0 // pred_region
    _
  $region9: #{lstm_gru_rnn_forward.1} parent=0 // pred_fallthru
    _
  // Predicated region
  $region10: #{lstm_gru_rnn_forward.1} parent=0 // pred_check
    _
  $region11: #{lstm_gru_rnn_forward.1} parent=0 // pred_check_branch
    %21 = sbr.rel (0) target = $region13
  $region12: #{lstm_gru_rnn_forward.1} parent=0 // pred_region
    _
  $region13: #{lstm_gru_rnn_forward.1} parent=0 // pred_fallthru
    _
  // Predicated region
  $region14: #{lstm_gru_rnn_forward.1} parent=0 // pred_check
    _
  $region15: #{lstm_gru_rnn_forward.1} parent=0 // pred_check_branch
    %23 = sbr.rel (0) target = $region17
  $region16: #{lstm_gru_rnn_forward.1} parent=0 // pred_region
    _
  $region17: #{lstm_gru_rnn_forward.1} parent=0 // pred_fallthru
    _
  // Predicated region
  $region18: #{lstm_gru_rnn_forward.1} parent=0 // pred_check
    _
  $region19: #{lstm_gru_rnn_forward.1} parent=0 // pred_check_branch
    %25 = sbr.rel (0) target = $region21
  $region20: #{lstm_gru_rnn_forward.1} parent=0 // pred_region
    _
  $region21: #{lstm_gru_rnn_forward.1} parent=0 // pred_fallthru
    _
  // Predicated region
  $region22: #{lstm_gru_rnn_forward.1} parent=0 // pred_check
    _
  $region23: #{lstm_gru_rnn_forward.1} parent=0 // pred_check_branch
    %27 = sbr.rel (0) target = $region25
  $region24: #{lstm_gru_rnn_forward.1} parent=0 // pred_region
    _
  $region25: #{lstm_gru_rnn_forward.1} parent=0 // pred_fallthru
    _
  // Predicated region
  $region26: #{lstm_gru_rnn_forward.1} parent=0 // pred_check
    _
  $region27: #{lstm_gru_rnn_forward.1} parent=0 // pred_check_branch
    %29 = sbr.rel (0) target = $region29
  $region28: #{lstm_gru_rnn_forward.1} parent=0 // pred_region
    _
  $region29: #{lstm_gru_rnn_forward.1} parent=0 // pred_fallthru
    _
  // Predicated region
  $region30: #{lstm_gru_rnn_forward.1} parent=0 // pred_check
    _
  $region31: #{lstm_gru_rnn_forward.1} parent=0 // pred_check_branch
    %31 = sbr.rel (0) target = $region33
  $region32: #{lstm_gru_rnn_forward.1} parent=0 // pred_region
    _
  $region33: #{lstm_gru_rnn_forward.1} parent=0 // pred_fallthru
    _
  // Predicated region
  $region34: #{lstm_gru_rnn_forward.1} parent=0 // pred_check
    _
  $region35: #{lstm_gru_rnn_forward.1} parent=0 // pred_check_branch
    %33 = sbr.rel (0) target = $region37
  $region36: #{lstm_gru_rnn_forward.1} parent=0 // pred_region
    _
  $region37: #{lstm_gru_rnn_forward.1} parent=0 // pred_fallthru
    _
  // Predicated region
  $region38: #{lstm_gru_rnn_forward.1} parent=0 // pred_check
    _
  $region39: #{lstm_gru_rnn_forward.1} parent=0 // pred_check_branch
    %35 = sbr.rel (0) target = $region41
  $region40: #{lstm_gru_rnn_forward.1} parent=0 // pred_region
    _
  $region41: #{lstm_gru_rnn_forward.1} parent=0 // pred_fallthru
    _
  // Predicated region
  $region42: #{lstm_gru_rnn_forward.1} parent=0 // pred_check
    _
  $region43: #{lstm_gru_rnn_forward.1} parent=0 // pred_check_branch
    %37 = sbr.rel (0) target = $region45
  $region44: #{lstm_gru_rnn_forward.1} parent=0 // pred_region
    _
  $region45: #{lstm_gru_rnn_forward.1} parent=0 // pred_fallthru
    _
  %p39 = scmp.eq.s32.totalorder 0, 0
  // Predicated region
  $region46: #{lstm_gru_rnn_forward.1} parent=0 // pred_check
    %p40 = pneg %p39
  $region47: #{lstm_gru_rnn_forward.1} parent=0 // pred_check_branch
    %42 = sbr.rel (%p40) target = $region49
  $region48: #{lstm_gru_rnn_forward.1} parent=0 // pred_region
    %vm43 = vcmask 261120
    %44 = vst.msk [vmem:[#allocation2] sm:$0xff] %vm43, 0.0
    %45 = vst.msk [vmem:[#allocation2 + $0x8] sm:$0xff] %vm43, 0.0
    %46 = vst.msk [vmem:[#allocation3] sm:$0xff] %vm43, 0.0
    %47 = vst.msk [vmem:[#allocation3 + $0x8] sm:$0xff] %vm43, 0.0
  $region49: #{lstm_gru_rnn_forward.1} parent=0 // pred_fallthru
    _
  %v48 = vld [vmem:[%s0] sm:$0xf]
  %v49 = vld [vmem:[%s0 + $0x4] sm:$0xf]
  %v50 = vld [vmem:[%s0 + $0x8] sm:$0xf]
  %v51 = vld [vmem:[%s0 + $0xc] sm:$0xf]
  %v52 = vld [vmem:[%s0 + $0x10] sm:$0xf]
  %v53 = vld [vmem:[%s0 + $0x14] sm:$0xf]
  %v54 = vld [vmem:[%s0 + $0x18] sm:$0xf]
  %v55 = vld [vmem:[%s0 + $0x1c] sm:$0xf]
  %v56 = vld [vmem:[%s1] sm:$0xf]
  %v57 = vld [vmem:[%s1 + $0x4] sm:$0xf]
  %v58 = vld [vmem:[%s3] sm:$0x1]
  %v60 = vlaneseq
  %v61 = vshrl.u32 %v60, 7
  %v62 = vsub.s32 0, %v61
  %v63 = vrot.slane %v58, %v62
  %v73 = vunpack.c.l.b16 %v48
  %v74 = vunpack.c.l.b16 %v49
  %v75 = vunpack.c.l.b16 %v50
  %v76 = vunpack.c.l.b16 %v51
  %v77 = vunpack.c.l.b16 %v52
  %v78 = vunpack.c.l.b16 %v53
  %v79 = vunpack.c.l.b16 %v54
  %v80 = vunpack.c.l.b16 %v55
  %v81 = vpack.c.b16 %v74, %v73
  %v82 = vpack.c.b16 %v76, %v75
  %v83 = vpack.c.b16 %v78, %v77
  %v84 = vpack.c.b16 %v80, %v79
  %v87 = vunpack.c.l.b16 %v56
  %v88 = vunpack.c.l.b16 %v57
  %v89 = vpack.c.b16 %v88, %v87
  %vm91 = vcmask 130048
  %v93 = vsel %vm91, %v81, 0
  %v96 = vsel %vm91, %v82, 0
  %v99 = vsel %vm91, %v83, 0
  %v102 = vsel %vm91, %v84, 0
  %104 = vmatprep.subr.bf16.mxu0 0
  %105 = vmatpush1.bf16.msra.mxu0 0
  %106 = vmatprep.subr.bf16.mxu0 0
  %107 = vmatpush1.bf16.msra.mxu0 0
  %108 = vmatprep.subr.bf16.mxu0 0
  %109 = vmatpush1.bf16.msra.mxu0 0
  %110 = vmatprep.subr.bf16.mxu0 0
  %111 = vmatpush1.bf16.msra.mxu0 0
  %112 = vmatprep.subr.bf16.mxu0 0
  %113 = vmatpush1.bf16.msra.mxu0 0
  %114 = vmatprep.subr.bf16.mxu0 0
  %115 = vmatpush1.bf16.msra.mxu0 0
  %116 = vmatprep.subr.bf16.mxu0 0
  %117 = vmatpush1.bf16.msra.mxu0 0
  %118 = vmatprep.subr.bf16.mxu0 0
  %119 = vmatpush1.bf16.msra.mxu0 %v89
  %120 = vmatprep.subr.bf16.mxu0 0
  %121 = vmatpush2.bf16.msra.mxu0 0
  %122 = vmatprep.subr.bf16.mxu0 0
  %123 = vmatpush2.bf16.msra.mxu0 0
  %124 = vmatprep.subr.bf16.mxu0 0
  %125 = vmatpush2.bf16.msra.mxu0 0
  %126 = vmatprep.subr.bf16.mxu0 0
  %127 = vmatpush2.bf16.msra.mxu0 0
  %128 = vmatprep.subr.bf16.mxu0 0
  %129 = vmatpush2.bf16.msra.mxu0 0
  %130 = vmatprep.subr.bf16.mxu0 0
  %131 = vmatpush2.bf16.msra.mxu0 0
  %132 = vmatprep.subr.bf16.mxu0 0
  %133 = vmatpush2.bf16.msra.mxu0 0
  %134 = vmatprep.subr.bf16.mxu0 0
  %135 = vmatpush2.bf16.msra.mxu0 0
  %136 = vmatprep.mubr.bf16.mxu0 0
  %137 = vmatmul.mubr.bf16.gmra.mxu0 %v93
  %v138 = vpop.f32.mrf.mxu0
  %v139 = vadd.f32 %v63, %v138
  %v140 = vpop.f32.mrf.mxu0
  %v141 = vpop.f32.mrf.mxu0
  %v142 = vadd.f32 %v63, %v141
  %v143 = vpop.f32.mrf.mxu0
  %144 = vmatprep.mubr.bf16.mxu0 0
  %145 = vmatmul.mubr.bf16.gmra.mxu0 %v96
  %v146 = vpop.f32.mrf.mxu0
  %v147 = vadd.f32 %v63, %v146
  %v148 = vpop.f32.mrf.mxu0
  %v149 = vpop.f32.mrf.mxu0
  %v150 = vadd.f32 %v63, %v149
  %v151 = vpop.f32.mrf.mxu0
  %152 = vmatprep.mubr.bf16.mxu0 0
  %153 = vmatmul.mubr.bf16.gmra.mxu0 %v99
  %v154 = vpop.f32.mrf.mxu0
  %v155 = vadd.f32 %v63, %v154
  %v156 = vpop.f32.mrf.mxu0
  %v157 = vpop.f32.mrf.mxu0
  %v158 = vadd.f32 %v63, %v157
  %v159 = vpop.f32.mrf.mxu0
  %160 = vmatprep.mubr.bf16.mxu0 0
  %161 = vmatmul.mubr.bf16.gmra.mxu0 %v102
  %v162 = vpop.f32.mrf.mxu0
  %v163 = vadd.f32 %v63, %v162
  %v164 = vpop.f32.mrf.mxu0
  %v165 = vpop.f32.mrf.mxu0
  %v166 = vadd.f32 %v63, %v165
  %v167 = vpop.f32.mrf.mxu0
  %168 = vdwg.mxu0
  %169 = vst [vmem:[#allocation4] sm:$0xff] %v139
  %170 = vst [vmem:[#allocation4 + $0x8] sm:$0xff] %v142
  %171 = vst [vmem:[#allocation4 + $0x10] sm:$0xff] %v147
  %172 = vst [vmem:[#allocation4 + $0x18] sm:$0xff] %v150
  %173 = vst [vmem:[#allocation4 + $0x20] sm:$0xff] %v155
  %174 = vst [vmem:[#allocation4 + $0x28] sm:$0xff] %v158
  %175 = vst [vmem:[#allocation4 + $0x30] sm:$0xff] %v163
  %176 = vst [vmem:[#allocation4 + $0x38] sm:$0xff] %v166
  %v177 = vld [vmem:[%s2] sm:$0xf]
  %v178 = vld [vmem:[%s2 + $0x4] sm:$0xf]
  %v179 = vld [vmem:[%s2 + $0x8] sm:$0xf]
  %v180 = vld [vmem:[%s2 + $0xc] sm:$0xf]
  %v181 = vld [vmem:[#allocation2] sm:$0xff]
  %v182 = vld [vmem:[#allocation3] sm:$0xff]
  %v183 = vld [vmem:[#allocation4] sm:$0xff]
  %v184 = vpack.c.bf16 %v181, %v181
  %v189 = vunpack.c.l.b16 %v177
  %v190 = vunpack.c.l.b16 %v178
  %v191 = vunpack.c.l.b16 %v179
  %v192 = vunpack.c.l.b16 %v180
  %v193 = vpack.c.b16 %v190, %v189
  %v194 = vpack.c.b16 %v192, %v191
  %vm197 = vcmask 261120
  %v199 = vsel %vm197, %v184, 0
  %201 = vmatprep.subr.bf16.mxu0 0
  %202 = vmatpush1.bf16.msra.mxu0 0
  %203 = vmatprep.subr.bf16.mxu0 0
  %204 = vmatpush1.bf16.msra.mxu0 0
  %205 = vmatprep.subr.bf16.mxu0 0
  %206 = vmatpush1.bf16.msra.mxu0 0
  %207 = vmatprep.subr.bf16.mxu0 0
  %208 = vmatpush1.bf16.msra.mxu0 0
  %209 = vmatprep.subr.bf16.mxu0 0
  %210 = vmatpush1.bf16.msra.mxu0 0
  %211 = vmatprep.subr.bf16.mxu0 0
  %212 = vmatpush1.bf16.msra.mxu0 0
  %213 = vmatprep.subr.bf16.mxu0 0
  %214 = vmatpush1.bf16.msra.mxu0 %v194
  %215 = vmatprep.subr.bf16.mxu0 0
  %216 = vmatpush1.bf16.msra.mxu0 %v193
  %217 = vmatprep.subr.bf16.mxu0 0
  %218 = vmatpush2.bf16.msra.mxu0 0
  %219 = vmatprep.subr.bf16.mxu0 0
  %220 = vmatpush2.bf16.msra.mxu0 0
  %221 = vmatprep.subr.bf16.mxu0 0
  %222 = vmatpush2.bf16.msra.mxu0 0
  %223 = vmatprep.subr.bf16.mxu0 0
  %224 = vmatpush2.bf16.msra.mxu0 0
  %225 = vmatprep.subr.bf16.mxu0 0
  %226 = vmatpush2.bf16.msra.mxu0 0
  %227 = vmatprep.subr.bf16.mxu0 0
  %228 = vmatpush2.bf16.msra.mxu0 0
  %229 = vmatprep.subr.bf16.mxu0 0
  %230 = vmatpush2.bf16.msra.mxu0 0
  %231 = vmatprep.subr.bf16.mxu0 0
  %232 = vmatpush2.bf16.msra.mxu0 0
  %233 = vmatprep.mubr.bf16.mxu0 0
  %234 = vmatmul.mubr.bf16.gmra.mxu0 %v199
  %v235 = vpop.f32.mrf.mxu0
  %v236 = vadd.f32 0.0, %v235
  %v237 = vpop.f32.mrf.mxu0
  %v238 = vpop.f32.mrf.mxu0
  %v239 = vpop.f32.mrf.mxu0
  %240 = vdwg.mxu0
  %v241 = vadd.f32 %v183, %v236
  %v242 = vxor.u32 %v241, 2147483648
  %v243 = vmul.f32 %v242, 1.442695
  %v244 = vpow.pop %v243
  %v245 = vadd.f32 %v244, 1.0
  %v246 = vrcp.pop %v245
  %v247 = vmul.f32 1.0, %v246
  %v248 = vtanh.pop %v241
  %250 = vrot.lane.b32.xlu0 %v182, 32
  %v251 = vpop.permute.xlu0 %250
  %v253 = vmul.f32 %v247, %v251
  %255 = vrot.lane.b32.xlu0 %v248, 64
  %v256 = vpop.permute.xlu0 %255
  %v258 = vmul.f32 %v247, %v256
  %260 = vrot.lane.b32.xlu0 %v258, 32
  %v261 = vpop.permute.xlu0 %260
  %v263 = vadd.f32 %v253, %v261
  %v264 = vtanh.pop %v263
  %266 = vrot.lane.b32.xlu0 %v264, 64
  %v267 = vpop.permute.xlu0 %266
  %v269 = vmul.f32 %v247, %v267
  %271 = vrot.lane.b32.xlu0 %v269, 32
  %v272 = vpop.permute.xlu0 %271
  %274 = vst.msk [vmem:[#allocation5] sm:$0xff] %vm197, %v272
  %s275 = scalar_lea.vmem [#allocation4], 8
  %v276 = vld [vmem:[%s275] sm:$0xff]
  %v277 = vpack.c.bf16 %v269, %v269
  %279 = vrot.lane.b32.xlu0 %v277, 32
  %v280 = vpop.permute.xlu0 %279
  %v282 = vsel %vm197, %v280, 0
  %284 = vmatprep.subr.bf16.mxu0 0
  %285 = vmatpush1.bf16.msra.mxu0 0
  %286 = vmatprep.subr.bf16.mxu0 0
  %287 = vmatpush1.bf16.msra.mxu0 0
  %288 = vmatprep.subr.bf16.mxu0 0
  %289 = vmatpush1.bf16.msra.mxu0 0
  %290 = vmatprep.subr.bf16.mxu0 0
  %291 = vmatpush1.bf16.msra.mxu0 0
  %292 = vmatprep.subr.bf16.mxu0 0
  %293 = vmatpush1.bf16.msra.mxu0 0
  %294 = vmatprep.subr.bf16.mxu0 0
  %295 = vmatpush1.bf16.msra.mxu0 0
  %296 = vmatprep.subr.bf16.mxu0 0
  %297 = vmatpush1.bf16.msra.mxu0 %v194
  %298 = vmatprep.subr.bf16.mxu0 0
  %299 = vmatpush1.bf16.msra.mxu0 %v193
  %300 = vmatprep.subr.bf16.mxu0 0
  %301 = vmatpush2.bf16.msra.mxu0 0
  %302 = vmatprep.subr.bf16.mxu0 0
  %303 = vmatpush2.bf16.msra.mxu0 0
  %304 = vmatprep.subr.bf16.mxu0 0
  %305 = vmatpush2.bf16.msra.mxu0 0
  %306 = vmatprep.subr.bf16.mxu0 0
  %307 = vmatpush2.bf16.msra.mxu0 0
  %308 = vmatprep.subr.bf16.mxu0 0
  %309 = vmatpush2.bf16.msra.mxu0 0
  %310 = vmatprep.subr.bf16.mxu0 0
  %311 = vmatpush2.bf16.msra.mxu0 0
  %312 = vmatprep.subr.bf16.mxu0 0
  %313 = vmatpush2.bf16.msra.mxu0 0
  %314 = vmatprep.subr.bf16.mxu0 0
  %315 = vmatpush2.bf16.msra.mxu0 0
  %316 = vmatprep.mubr.bf16.mxu0 0
  %317 = vmatmul.mubr.bf16.gmra.mxu0 %v282
  %v318 = vpop.f32.mrf.mxu0
  %v319 = vadd.f32 0.0, %v318
  %v320 = vpop.f32.mrf.mxu0
  %v321 = vpop.f32.mrf.mxu0
  %v322 = vpop.f32.mrf.mxu0
  %323 = vdwg.mxu0
  %v324 = vadd.f32 %v276, %v319
  %v325 = vxor.u32 %v324, 2147483648
  %v326 = vmul.f32 %v325, 1.442695
  %v327 = vpow.pop %v326
  %v328 = vadd.f32 %v327, 1.0
  %v329 = vrcp.pop %v328
  %v330 = vmul.f32 1.0, %v329
  %v331 = vtanh.pop %v324
  %v332 = vmul.f32 %v330, %v263
  %334 = vrot.lane.b32.xlu0 %v331, 64
  %v335 = vpop.permute.xlu0 %334
  %v337 = vmul.f32 %v330, %v335
  %339 = vrot.lane.b32.xlu0 %v337, 32
  %v340 = vpop.permute.xlu0 %339
  %v342 = vadd.f32 %v332, %v340
  %v343 = vtanh.pop %v342
  %345 = vrot.lane.b32.xlu0 %v343, 64
  %v346 = vpop.permute.xlu0 %345
  %v348 = vmul.f32 %v330, %v346
  %350 = vrot.lane.b32.xlu0 %v348, 32
  %v351 = vpop.permute.xlu0 %350
  %s353 = scalar_lea.vmem [#allocation5], 8
  %354 = vst.msk [vmem:[%s353] sm:$0xff] %vm197, %v351
  %s355 = scalar_lea.vmem [#allocation4], 16
  %v356 = vld [vmem:[%s355] sm:$0xff]
  %v357 = vpack.c.bf16 %v348, %v348
  %359 = vrot.lane.b32.xlu0 %v357, 32
  %v360 = vpop.permute.xlu0 %359
  %v362 = vsel %vm197, %v360, 0
  %364 = vmatprep.subr.bf16.mxu0 0
  %365 = vmatpush1.bf16.msra.mxu0 0
  %366 = vmatprep.subr.bf16.mxu0 0
  %367 = vmatpush1.bf16.msra.mxu0 0
  %368 = vmatprep.subr.bf16.mxu0 0
  %369 = vmatpush1.bf16.msra.mxu0 0
  %370 = vmatprep.subr.bf16.mxu0 0
  %371 = vmatpush1.bf16.msra.mxu0 0
  %372 = vmatprep.subr.bf16.mxu0 0
  %373 = vmatpush1.bf16.msra.mxu0 0
  %374 = vmatprep.subr.bf16.mxu0 0
  %375 = vmatpush1.bf16.msra.mxu0 0
  %376 = vmatprep.subr.bf16.mxu0 0
  %377 = vmatpush1.bf16.msra.mxu0 %v194
  %378 = vmatprep.subr.bf16.mxu0 0
  %379 = vmatpush1.bf16.msra.mxu0 %v193
  %380 = vmatprep.subr.bf16.mxu0 0
  %381 = vmatpush2.bf16.msra.mxu0 0
  %382 = vmatprep.subr.bf16.mxu0 0
  %383 = vmatpush2.bf16.msra.mxu0 0
  %384 = vmatprep.subr.bf16.mxu0 0
  %385 = vmatpush2.bf16.msra.mxu0 0
  %386 = vmatprep.subr.bf16.mxu0 0
  %387 = vmatpush2.bf16.msra.mxu0 0
  %388 = vmatprep.subr.bf16.mxu0 0
  %389 = vmatpush2.bf16.msra.mxu0 0
  %390 = vmatprep.subr.bf16.mxu0 0
  %391 = vmatpush2.bf16.msra.mxu0 0
  %392 = vmatprep.subr.bf16.mxu0 0
  %393 = vmatpush2.bf16.msra.mxu0 0
  %394 = vmatprep.subr.bf16.mxu0 0
  %395 = vmatpush2.bf16.msra.mxu0 0
  %396 = vmatprep.mubr.bf16.mxu0 0
  %397 = vmatmul.mubr.bf16.gmra.mxu0 %v362
  %v398 = vpop.f32.mrf.mxu0
  %v399 = vadd.f32 0.0, %v398
  %v400 = vpop.f32.mrf.mxu0
  %v401 = vpop.f32.mrf.mxu0
  %v402 = vpop.f32.mrf.mxu0
  %403 = vdwg.mxu0
  %v404 = vadd.f32 %v356, %v399
  %v405 = vxor.u32 %v404, 2147483648
  %v406 = vmul.f32 %v405, 1.442695
  %v407 = vpow.pop %v406
  %v408 = vadd.f32 %v407, 1.0
  %v409 = vrcp.pop %v408
  %v410 = vmul.f32 1.0, %v409
  %v411 = vtanh.pop %v404
  %v412 = vmul.f32 %v410, %v342
  %414 = vrot.lane.b32.xlu0 %v411, 64
  %v415 = vpop.permute.xlu0 %414
  %v417 = vmul.f32 %v410, %v415
  %419 = vrot.lane.b32.xlu0 %v417, 32
  %v420 = vpop.permute.xlu0 %419
  %v422 = vadd.f32 %v412, %v420
  %v423 = vtanh.pop %v422
  %425 = vrot.lane.b32.xlu0 %v423, 64
  %v426 = vpop.permute.xlu0 %425
  %v428 = vmul.f32 %v410, %v426
  %430 = vrot.lane.b32.xlu0 %v428, 32
  %v431 = vpop.permute.xlu0 %430
  %s433 = scalar_lea.vmem [#allocation5], 16
  %434 = vst.msk [vmem:[%s433] sm:$0xff] %vm197, %v431
  %s435 = scalar_lea.vmem [#allocation4], 24
  %v436 = vld [vmem:[%s435] sm:$0xff]
  %v437 = vpack.c.bf16 %v428, %v428
  %439 = vrot.lane.b32.xlu0 %v437, 32
  %v440 = vpop.permute.xlu0 %439
  %v442 = vsel %vm197, %v440, 0
  %444 = vmatprep.subr.bf16.mxu0 0
  %445 = vmatpush1.bf16.msra.mxu0 0
  %446 = vmatprep.subr.bf16.mxu0 0
  %447 = vmatpush1.bf16.msra.mxu0 0
  %448 = vmatprep.subr.bf16.mxu0 0
  %449 = vmatpush1.bf16.msra.mxu0 0
  %450 = vmatprep.subr.bf16.mxu0 0
  %451 = vmatpush1.bf16.msra.mxu0 0
  %452 = vmatprep.subr.bf16.mxu0 0
  %453 = vmatpush1.bf16.msra.mxu0 0
  %454 = vmatprep.subr.bf16.mxu0 0
  %455 = vmatpush1.bf16.msra.mxu0 0
  %456 = vmatprep.subr.bf16.mxu0 0
  %457 = vmatpush1.bf16.msra.mxu0 %v194
  %458 = vmatprep.subr.bf16.mxu0 0
  %459 = vmatpush1.bf16.msra.mxu0 %v193
  %460 = vmatprep.subr.bf16.mxu0 0
  %461 = vmatpush2.bf16.msra.mxu0 0
  %462 = vmatprep.subr.bf16.mxu0 0
  %463 = vmatpush2.bf16.msra.mxu0 0
  %464 = vmatprep.subr.bf16.mxu0 0
  %465 = vmatpush2.bf16.msra.mxu0 0
  %466 = vmatprep.subr.bf16.mxu0 0
  %467 = vmatpush2.bf16.msra.mxu0 0
  %468 = vmatprep.subr.bf16.mxu0 0
  %469 = vmatpush2.bf16.msra.mxu0 0
  %470 = vmatprep.subr.bf16.mxu0 0
  %471 = vmatpush2.bf16.msra.mxu0 0
  %472 = vmatprep.subr.bf16.mxu0 0
  %473 = vmatpush2.bf16.msra.mxu0 0
  %474 = vmatprep.subr.bf16.mxu0 0
  %475 = vmatpush2.bf16.msra.mxu0 0
  %476 = vmatprep.mubr.bf16.mxu0 0
  %477 = vmatmul.mubr.bf16.gmra.mxu0 %v442
  %v478 = vpop.f32.mrf.mxu0
  %v479 = vadd.f32 0.0, %v478
  %v480 = vpop.f32.mrf.mxu0
  %v481 = vpop.f32.mrf.mxu0
  %v482 = vpop.f32.mrf.mxu0
  %483 = vdwg.mxu0
  %v484 = vadd.f32 %v436, %v479
  %v485 = vxor.u32 %v484, 2147483648
  %v486 = vmul.f32 %v485, 1.442695
  %v487 = vpow.pop %v486
  %v488 = vadd.f32 %v487, 1.0
  %v489 = vrcp.pop %v488
  %v490 = vmul.f32 1.0, %v489
  %v491 = vtanh.pop %v484
  %v492 = vmul.f32 %v490, %v422
  %494 = vrot.lane.b32.xlu0 %v491, 64
  %v495 = vpop.permute.xlu0 %494
  %v497 = vmul.f32 %v490, %v495
  %499 = vrot.lane.b32.xlu0 %v497, 32
  %v500 = vpop.permute.xlu0 %499
  %v502 = vadd.f32 %v492, %v500
  %v503 = vtanh.pop %v502
  %505 = vrot.lane.b32.xlu0 %v503, 64
  %v506 = vpop.permute.xlu0 %505
  %v508 = vmul.f32 %v490, %v506
  %510 = vrot.lane.b32.xlu0 %v508, 32
  %v511 = vpop.permute.xlu0 %510
  %s513 = scalar_lea.vmem [#allocation5], 24
  %514 = vst.msk [vmem:[%s513] sm:$0xff] %vm197, %v511
  %s515 = scalar_lea.vmem [#allocation4], 32
  %v516 = vld [vmem:[%s515] sm:$0xff]
  %v517 = vpack.c.bf16 %v508, %v508
  %519 = vrot.lane.b32.xlu0 %v517, 32
  %v520 = vpop.permute.xlu0 %519
  %v522 = vsel %vm197, %v520, 0
  %524 = vmatprep.subr.bf16.mxu0 0
  %525 = vmatpush1.bf16.msra.mxu0 0
  %526 = vmatprep.subr.bf16.mxu0 0
  %527 = vmatpush1.bf16.msra.mxu0 0
  %528 = vmatprep.subr.bf16.mxu0 0
  %529 = vmatpush1.bf16.msra.mxu0 0
  %530 = vmatprep.subr.bf16.mxu0 0
  %531 = vmatpush1.bf16.msra.mxu0 0
  %532 = vmatprep.subr.bf16.mxu0 0
  %533 = vmatpush1.bf16.msra.mxu0 0
  %534 = vmatprep.subr.bf16.mxu0 0
  %535 = vmatpush1.bf16.msra.mxu0 0
  %536 = vmatprep.subr.bf16.mxu0 0
  %537 = vmatpush1.bf16.msra.mxu0 %v194
  %538 = vmatprep.subr.bf16.mxu0 0
  %539 = vmatpush1.bf16.msra.mxu0 %v193
  %540 = vmatprep.subr.bf16.mxu0 0
  %541 = vmatpush2.bf16.msra.mxu0 0
  %542 = vmatprep.subr.bf16.mxu0 0
  %543 = vmatpush2.bf16.msra.mxu0 0
  %544 = vmatprep.subr.bf16.mxu0 0
  %545 = vmatpush2.bf16.msra.mxu0 0
  %546 = vmatprep.subr.bf16.mxu0 0
  %547 = vmatpush2.bf16.msra.mxu0 0
  %548 = vmatprep.subr.bf16.mxu0 0
  %549 = vmatpush2.bf16.msra.mxu0 0
  %550 = vmatprep.subr.bf16.mxu0 0
  %551 = vmatpush2.bf16.msra.mxu0 0
  %552 = vmatprep.subr.bf16.mxu0 0
  %553 = vmatpush2.bf16.msra.mxu0 0
  %554 = vmatprep.subr.bf16.mxu0 0
  %555 = vmatpush2.bf16.msra.mxu0 0
  %556 = vmatprep.mubr.bf16.mxu0 0
  %557 = vmatmul.mubr.bf16.gmra.mxu0 %v522
  %v558 = vpop.f32.mrf.mxu0
  %v559 = vadd.f32 0.0, %v558
  %v560 = vpop.f32.mrf.mxu0
  %v561 = vpop.f32.mrf.mxu0
  %v562 = vpop.f32.mrf.mxu0
  %563 = vdwg.mxu0
  %v564 = vadd.f32 %v516, %v559
  %v565 = vxor.u32 %v564, 2147483648
  %v566 = vmul.f32 %v565, 1.442695
  %v567 = vpow.pop %v566
  %v568 = vadd.f32 %v567, 1.0
  %v569 = vrcp.pop %v568
  %v570 = vmul.f32 1.0, %v569
  %v571 = vtanh.pop %v564
  %v572 = vmul.f32 %v570, %v502
  %574 = vrot.lane.b32.xlu0 %v571, 64
  %v575 = vpop.permute.xlu0 %574
  %v577 = vmul.f32 %v570, %v575
  %579 = vrot.lane.b32.xlu0 %v577, 32
  %v580 = vpop.permute.xlu0 %579
  %v582 = vadd.f32 %v572, %v580
  %v583 = vtanh.pop %v582
  %585 = vrot.lane.b32.xlu0 %v583, 64
  %v586 = vpop.permute.xlu0 %585
  %v588 = vmul.f32 %v570, %v586
  %590 = vrot.lane.b32.xlu0 %v588, 32
  %v591 = vpop.permute.xlu0 %590
  %s593 = scalar_lea.vmem [#allocation5], 32
  %594 = vst.msk [vmem:[%s593] sm:$0xff] %vm197, %v591
  %s595 = scalar_lea.vmem [#allocation4], 40
  %v596 = vld [vmem:[%s595] sm:$0xff]
  %v597 = vpack.c.bf16 %v588, %v588
  %599 = vrot.lane.b32.xlu0 %v597, 32
  %v600 = vpop.permute.xlu0 %599
  %v602 = vsel %vm197, %v600, 0
  %604 = vmatprep.subr.bf16.mxu0 0
  %605 = vmatpush1.bf16.msra.mxu0 0
  %606 = vmatprep.subr.bf16.mxu0 0
  %607 = vmatpush1.bf16.msra.mxu0 0
  %608 = vmatprep.subr.bf16.mxu0 0
  %609 = vmatpush1.bf16.msra.mxu0 0
  %610 = vmatprep.subr.bf16.mxu0 0
  %611 = vmatpush1.bf16.msra.mxu0 0
  %612 = vmatprep.subr.bf16.mxu0 0
  %613 = vmatpush1.bf16.msra.mxu0 0
  %614 = vmatprep.subr.bf16.mxu0 0
  %615 = vmatpush1.bf16.msra.mxu0 0
  %616 = vmatprep.subr.bf16.mxu0 0
  %617 = vmatpush1.bf16.msra.mxu0 %v194
  %618 = vmatprep.subr.bf16.mxu0 0
  %619 = vmatpush1.bf16.msra.mxu0 %v193
  %620 = vmatprep.subr.bf16.mxu0 0
  %621 = vmatpush2.bf16.msra.mxu0 0
  %622 = vmatprep.subr.bf16.mxu0 0
  %623 = vmatpush2.bf16.msra.mxu0 0
  %624 = vmatprep.subr.bf16.mxu0 0
  %625 = vmatpush2.bf16.msra.mxu0 0
  %626 = vmatprep.subr.bf16.mxu0 0
  %627 = vmatpush2.bf16.msra.mxu0 0
  %628 = vmatprep.subr.bf16.mxu0 0
  %629 = vmatpush2.bf16.msra.mxu0 0
  %630 = vmatprep.subr.bf16.mxu0 0
  %631 = vmatpush2.bf16.msra.mxu0 0
  %632 = vmatprep.subr.bf16.mxu0 0
  %633 = vmatpush2.bf16.msra.mxu0 0
  %634 = vmatprep.subr.bf16.mxu0 0
  %635 = vmatpush2.bf16.msra.mxu0 0
  %636 = vmatprep.mubr.bf16.mxu0 0
  %637 = vmatmul.mubr.bf16.gmra.mxu0 %v602
  %v638 = vpop.f32.mrf.mxu0
  %v639 = vadd.f32 0.0, %v638
  %v640 = vpop.f32.mrf.mxu0
  %v641 = vpop.f32.mrf.mxu0
  %v642 = vpop.f32.mrf.mxu0
  %643 = vdwg.mxu0
  %v644 = vadd.f32 %v596, %v639
  %v645 = vxor.u32 %v644, 2147483648
  %v646 = vmul.f32 %v645, 1.442695
  %v647 = vpow.pop %v646
  %v648 = vadd.f32 %v647, 1.0
  %v649 = vrcp.pop %v648
  %v650 = vmul.f32 1.0, %v649
  %v651 = vtanh.pop %v644
  %v652 = vmul.f32 %v650, %v582
  %654 = vrot.lane.b32.xlu0 %v651, 64
  %v655 = vpop.permute.xlu0 %654
  %v657 = vmul.f32 %v650, %v655
  %659 = vrot.lane.b32.xlu0 %v657, 32
  %v660 = vpop.permute.xlu0 %659
  %v662 = vadd.f32 %v652, %v660
  %v663 = vtanh.pop %v662
  %665 = vrot.lane.b32.xlu0 %v663, 64
  %v666 = vpop.permute.xlu0 %665
  %v668 = vmul.f32 %v650, %v666
  %670 = vrot.lane.b32.xlu0 %v668, 32
  %v671 = vpop.permute.xlu0 %670
  %s673 = scalar_lea.vmem [#allocation5], 40
  %674 = vst.msk [vmem:[%s673] sm:$0xff] %vm197, %v671
  %s675 = scalar_lea.vmem [#allocation4], 48
  %v676 = vld [vmem:[%s675] sm:$0xff]
  %v677 = vpack.c.bf16 %v668, %v668
  %679 = vrot.lane.b32.xlu0 %v677, 32
  %v680 = vpop.permute.xlu0 %679
  %v682 = vsel %vm197, %v680, 0
  %684 = vmatprep.subr.bf16.mxu0 0
  %685 = vmatpush1.bf16.msra.mxu0 0
  %686 = vmatprep.subr.bf16.mxu0 0
  %687 = vmatpush1.bf16.msra.mxu0 0
  %688 = vmatprep.subr.bf16.mxu0 0
  %689 = vmatpush1.bf16.msra.mxu0 0
  %690 = vmatprep.subr.bf16.mxu0 0
  %691 = vmatpush1.bf16.msra.mxu0 0
  %692 = vmatprep.subr.bf16.mxu0 0
  %693 = vmatpush1.bf16.msra.mxu0 0
  %694 = vmatprep.subr.bf16.mxu0 0
  %695 = vmatpush1.bf16.msra.mxu0 0
  %696 = vmatprep.subr.bf16.mxu0 0
  %697 = vmatpush1.bf16.msra.mxu0 %v194
  %698 = vmatprep.subr.bf16.mxu0 0
  %699 = vmatpush1.bf16.msra.mxu0 %v193
  %700 = vmatprep.subr.bf16.mxu0 0
  %701 = vmatpush2.bf16.msra.mxu0 0
  %702 = vmatprep.subr.bf16.mxu0 0
  %703 = vmatpush2.bf16.msra.mxu0 0
  %704 = vmatprep.subr.bf16.mxu0 0
  %705 = vmatpush2.bf16.msra.mxu0 0
  %706 = vmatprep.subr.bf16.mxu0 0
  %707 = vmatpush2.bf16.msra.mxu0 0
  %708 = vmatprep.subr.bf16.mxu0 0
  %709 = vmatpush2.bf16.msra.mxu0 0
  %710 = vmatprep.subr.bf16.mxu0 0
  %711 = vmatpush2.bf16.msra.mxu0 0
  %712 = vmatprep.subr.bf16.mxu0 0
  %713 = vmatpush2.bf16.msra.mxu0 0
  %714 = vmatprep.subr.bf16.mxu0 0
  %715 = vmatpush2.bf16.msra.mxu0 0
  %716 = vmatprep.mubr.bf16.mxu0 0
  %717 = vmatmul.mubr.bf16.gmra.mxu0 %v682
  %v718 = vpop.f32.mrf.mxu0
  %v719 = vadd.f32 0.0, %v718
  %v720 = vpop.f32.mrf.mxu0
  %v721 = vpop.f32.mrf.mxu0
  %v722 = vpop.f32.mrf.mxu0
  %723 = vdwg.mxu0
  %v724 = vadd.f32 %v676, %v719
  %v725 = vxor.u32 %v724, 2147483648
  %v726 = vmul.f32 %v725, 1.442695
  %v727 = vpow.pop %v726
  %v728 = vadd.f32 %v727, 1.0
  %v729 = vrcp.pop %v728
  %v730 = vmul.f32 1.0, %v729
  %v731 = vtanh.pop %v724
  %v732 = vmul.f32 %v730, %v662
  %734 = vrot.lane.b32.xlu0 %v731, 64
  %v735 = vpop.permute.xlu0 %734
  %v737 = vmul.f32 %v730, %v735
  %739 = vrot.lane.b32.xlu0 %v737, 32
  %v740 = vpop.permute.xlu0 %739
  %v742 = vadd.f32 %v732, %v740
  %v743 = vtanh.pop %v742
  %745 = vrot.lane.b32.xlu0 %v743, 64
  %v746 = vpop.permute.xlu0 %745
  %v748 = vmul.f32 %v730, %v746
  %750 = vrot.lane.b32.xlu0 %v748, 32
  %v751 = vpop.permute.xlu0 %750
  %s753 = scalar_lea.vmem [#allocation5], 48
  %754 = vst.msk [vmem:[%s753] sm:$0xff] %vm197, %v751
  %s755 = scalar_lea.vmem [#allocation4], 56
  %v756 = vld [vmem:[%s755] sm:$0xff]
  %v757 = vpack.c.bf16 %v748, %v748
  %759 = vrot.lane.b32.xlu0 %v757, 32
  %v760 = vpop.permute.xlu0 %759
  %v762 = vsel %vm197, %v760, 0
  %764 = vmatprep.subr.bf16.mxu0 0
  %765 = vmatpush1.bf16.msra.mxu0 0
  %766 = vmatprep.subr.bf16.mxu0 0
  %767 = vmatpush1.bf16.msra.mxu0 0
  %768 = vmatprep.subr.bf16.mxu0 0
  %769 = vmatpush1.bf16.msra.mxu0 0
  %770 = vmatprep.subr.bf16.mxu0 0
  %771 = vmatpush1.bf16.msra.mxu0 0
  %772 = vmatprep.subr.bf16.mxu0 0
  %773 = vmatpush1.bf16.msra.mxu0 0
  %774 = vmatprep.subr.bf16.mxu0 0
  %775 = vmatpush1.bf16.msra.mxu0 0
  %776 = vmatprep.subr.bf16.mxu0 0
  %777 = vmatpush1.bf16.msra.mxu0 %v194
  %778 = vmatprep.subr.bf16.mxu0 0
  %779 = vmatpush1.bf16.msra.mxu0 %v193
  %780 = vmatprep.subr.bf16.mxu0 0
  %781 = vmatpush2.bf16.msra.mxu0 0
  %782 = vmatprep.subr.bf16.mxu0 0
  %783 = vmatpush2.bf16.msra.mxu0 0
  %784 = vmatprep.subr.bf16.mxu0 0
  %785 = vmatpush2.bf16.msra.mxu0 0
  %786 = vmatprep.subr.bf16.mxu0 0
  %787 = vmatpush2.bf16.msra.mxu0 0
  %788 = vmatprep.subr.bf16.mxu0 0
  %789 = vmatpush2.bf16.msra.mxu0 0
  %790 = vmatprep.subr.bf16.mxu0 0
  %791 = vmatpush2.bf16.msra.mxu0 0
  %792 = vmatprep.subr.bf16.mxu0 0
  %793 = vmatpush2.bf16.msra.mxu0 0
  %794 = vmatprep.subr.bf16.mxu0 0
  %795 = vmatpush2.bf16.msra.mxu0 0
  %796 = vmatprep.mubr.bf16.mxu0 0
  %797 = vmatmul.mubr.bf16.gmra.mxu0 %v762
  %v798 = vpop.f32.mrf.mxu0
  %v799 = vadd.f32 0.0, %v798
  %v800 = vpop.f32.mrf.mxu0
  %v801 = vpop.f32.mrf.mxu0
  %v802 = vpop.f32.mrf.mxu0
  %803 = vdwg.mxu0
  %v804 = vadd.f32 %v756, %v799
  %v805 = vxor.u32 %v804, 2147483648
  %v806 = vmul.f32 %v805, 1.442695
  %v807 = vpow.pop %v806
  %v808 = vadd.f32 %v807, 1.0
  %v809 = vrcp.pop %v808
  %v810 = vmul.f32 1.0, %v809
  %v811 = vtanh.pop %v804
  %v812 = vmul.f32 %v810, %v742
  %814 = vrot.lane.b32.xlu0 %v811, 64
  %v815 = vpop.permute.xlu0 %814
  %v817 = vmul.f32 %v810, %v815
  %819 = vrot.lane.b32.xlu0 %v817, 32
  %v820 = vpop.permute.xlu0 %819
  %v822 = vadd.f32 %v812, %v820
  %v823 = vtanh.pop %v822
  %825 = vrot.lane.b32.xlu0 %v823, 64
  %v826 = vpop.permute.xlu0 %825
  %v828 = vmul.f32 %v810, %v826
  %830 = vrot.lane.b32.xlu0 %v828, 32
  %v831 = vpop.permute.xlu0 %830
  %s833 = scalar_lea.vmem [#allocation5], 56
  %834 = vst.msk [vmem:[%s833] sm:$0xff] %vm197, %v831
  %835 = vst.msk [vmem:[#allocation2] sm:$0xff] %vm197, %v831
  %837 = vrot.lane.b32.xlu0 %v822, 96
  %v838 = vpop.permute.xlu0 %837
  %840 = vst.msk [vmem:[#allocation3] sm:$0xff] %vm197, %v838
  %v841 = vld [vmem:[#allocation5] sm:$0xff]
  %v842 = vld [vmem:[#allocation5 + $0x8] sm:$0xff]
  %v843 = vld [vmem:[#allocation5 + $0x10] sm:$0xff]
  %v844 = vld [vmem:[#allocation5 + $0x18] sm:$0xff]
  %v845 = vld [vmem:[#allocation5 + $0x20] sm:$0xff]
  %v846 = vld [vmem:[#allocation5 + $0x28] sm:$0xff]
  %v847 = vld [vmem:[#allocation5 + $0x30] sm:$0xff]
  %v848 = vld [vmem:[#allocation5 + $0x38] sm:$0xff]
  %v849 = vpack.c.bf16 %v842, %v841
  %v850 = vpack.c.bf16 %v844, %v843
  %v851 = vpack.c.bf16 %v846, %v845
  %v852 = vpack.c.bf16 %v848, %v847
  %v853 = vld [vmem:[%s4] sm:$0xf]
  %v854 = vld [vmem:[%s4 + $0x4] sm:$0xf]
  %v855 = vld [vmem:[%s4 + $0x8] sm:$0xf]
  %v856 = vld [vmem:[%s4 + $0xc] sm:$0xf]
  %v857 = vld [vmem:[%s6] sm:$0x1]
  %v859 = vlaneseq
  %v860 = vshrl.u32 %v859, 7
  %v861 = vsub.s32 0, %v860
  %v862 = vrot.slane %v857, %v861
  %v868 = vunpack.c.l.b16 %v853
  %v869 = vunpack.c.l.b16 %v854
  %v870 = vunpack.c.l.b16 %v855
  %v871 = vunpack.c.l.b16 %v856
  %v872 = vpack.c.b16 %v869, %v868
  %v873 = vpack.c.b16 %v871, %v870
  %v877 = vsel %vm197, %v849, 0
  %v880 = vsel %vm197, %v850, 0
  %v883 = vsel %vm197, %v851, 0
  %v886 = vsel %vm197, %v852, 0
  %888 = vmatprep.subr.bf16.mxu0 0
  %889 = vmatpush1.bf16.msra.mxu0 0
  %890 = vmatprep.subr.bf16.mxu0 0
  %891 = vmatpush1.bf16.msra.mxu0 0
  %892 = vmatprep.subr.bf16.mxu0 0
  %893 = vmatpush1.bf16.msra.mxu0 0
  %894 = vmatprep.subr.bf16.mxu0 0
  %895 = vmatpush1.bf16.msra.mxu0 0
  %896 = vmatprep.subr.bf16.mxu0 0
  %897 = vmatpush1.bf16.msra.mxu0 0
  %898 = vmatprep.subr.bf16.mxu0 0
  %899 = vmatpush1.bf16.msra.mxu0 0
  %900 = vmatprep.subr.bf16.mxu0 0
  %901 = vmatpush1.bf16.msra.mxu0 %v873
  %902 = vmatprep.subr.bf16.mxu0 0
  %903 = vmatpush1.bf16.msra.mxu0 %v872
  %904 = vmatprep.subr.bf16.mxu0 0
  %905 = vmatpush2.bf16.msra.mxu0 0
  %906 = vmatprep.subr.bf16.mxu0 0
  %907 = vmatpush2.bf16.msra.mxu0 0
  %908 = vmatprep.subr.bf16.mxu0 0
  %909 = vmatpush2.bf16.msra.mxu0 0
  %910 = vmatprep.subr.bf16.mxu0 0
  %911 = vmatpush2.bf16.msra.mxu0 0
  %912 = vmatprep.subr.bf16.mxu0 0
  %913 = vmatpush2.bf16.msra.mxu0 0
  %914 = vmatprep.subr.bf16.mxu0 0
  %915 = vmatpush2.bf16.msra.mxu0 0
  %916 = vmatprep.subr.bf16.mxu0 0
  %917 = vmatpush2.bf16.msra.mxu0 0
  %918 = vmatprep.subr.bf16.mxu0 0
  %919 = vmatpush2.bf16.msra.mxu0 0
  %920 = vmatprep.mubr.bf16.mxu0 0
  %921 = vmatmul.mubr.bf16.gmra.mxu0 %v877
  %v922 = vpop.f32.mrf.mxu0
  %v923 = vadd.f32 %v862, %v922
  %v924 = vpop.f32.mrf.mxu0
  %v925 = vpop.f32.mrf.mxu0
  %v926 = vadd.f32 %v862, %v925
  %v927 = vpop.f32.mrf.mxu0
  %928 = vmatprep.mubr.bf16.mxu0 0
  %929 = vmatmul.mubr.bf16.gmra.mxu0 %v880
  %v930 = vpop.f32.mrf.mxu0
  %v931 = vadd.f32 %v862, %v930
  %v932 = vpop.f32.mrf.mxu0
  %v933 = vpop.f32.mrf.mxu0
  %v934 = vadd.f32 %v862, %v933
  %v935 = vpop.f32.mrf.mxu0
  %936 = vmatprep.mubr.bf16.mxu0 0
  %937 = vmatmul.mubr.bf16.gmra.mxu0 %v883
  %v938 = vpop.f32.mrf.mxu0
  %v939 = vadd.f32 %v862, %v938
  %v940 = vpop.f32.mrf.mxu0
  %v941 = vpop.f32.mrf.mxu0
  %v942 = vadd.f32 %v862, %v941
  %v943 = vpop.f32.mrf.mxu0
  %944 = vmatprep.mubr.bf16.mxu0 0
  %945 = vmatmul.mubr.bf16.gmra.mxu0 %v886
  %v946 = vpop.f32.mrf.mxu0
  %v947 = vadd.f32 %v862, %v946
  %v948 = vpop.f32.mrf.mxu0
  %v949 = vpop.f32.mrf.mxu0
  %v950 = vadd.f32 %v862, %v949
  %v951 = vpop.f32.mrf.mxu0
  %952 = vdwg.mxu0
  %953 = vst [vmem:[#allocation4] sm:$0xff] %v923
  %954 = vst [vmem:[#allocation4 + $0x8] sm:$0xff] %v926
  %955 = vst [vmem:[#allocation4 + $0x10] sm:$0xff] %v931
  %956 = vst [vmem:[#allocation4 + $0x18] sm:$0xff] %v934
  %957 = vst [vmem:[#allocation4 + $0x20] sm:$0xff] %v939
  %958 = vst [vmem:[#allocation4 + $0x28] sm:$0xff] %v942
  %959 = vst [vmem:[#allocation4 + $0x30] sm:$0xff] %v947
  %960 = vst [vmem:[#allocation4 + $0x38] sm:$0xff] %v950
  %v961 = vld [vmem:[%s5] sm:$0xf]
  %v962 = vld [vmem:[%s5 + $0x4] sm:$0xf]
  %v963 = vld [vmem:[%s5 + $0x8] sm:$0xf]
  %v964 = vld [vmem:[%s5 + $0xc] sm:$0xf]
  %s965 = scalar_lea.vmem [#allocation2], 8
  %v966 = vld [vmem:[%s965] sm:$0xff]
  %s967 = scalar_lea.vmem [#allocation3], 8
  %v968 = vld [vmem:[%s967] sm:$0xff]
  %v969 = vld [vmem:[#allocation4] sm:$0xff]
  %v970 = vpack.c.bf16 %v966, %v966
  %v975 = vunpack.c.l.b16 %v961
  %v976 = vunpack.c.l.b16 %v962
  %v977 = vunpack.c.l.b16 %v963
  %v978 = vunpack.c.l.b16 %v964
  %v979 = vpack.c.b16 %v976, %v975
  %v980 = vpack.c.b16 %v978, %v977
  %v984 = vsel %vm197, %v970, 0
  %986 = vmatprep.subr.bf16.mxu0 0
  %987 = vmatpush1.bf16.msra.mxu0 0
  %988 = vmatprep.subr.bf16.mxu0 0
  %989 = vmatpush1.bf16.msra.mxu0 0
  %990 = vmatprep.subr.bf16.mxu0 0
  %991 = vmatpush1.bf16.msra.mxu0 0
  %992 = vmatprep.subr.bf16.mxu0 0
  %993 = vmatpush1.bf16.msra.mxu0 0
  %994 = vmatprep.subr.bf16.mxu0 0
  %995 = vmatpush1.bf16.msra.mxu0 0
  %996 = vmatprep.subr.bf16.mxu0 0
  %997 = vmatpush1.bf16.msra.mxu0 0
  %998 = vmatprep.subr.bf16.mxu0 0
  %999 = vmatpush1.bf16.msra.mxu0 %v980
  %1000 = vmatprep.subr.bf16.mxu0 0
  %1001 = vmatpush1.bf16.msra.mxu0 %v979
  %1002 = vmatprep.subr.bf16.mxu0 0
  %1003 = vmatpush2.bf16.msra.mxu0 0
  %1004 = vmatprep.subr.bf16.mxu0 0
  %1005 = vmatpush2.bf16.msra.mxu0 0
  %1006 = vmatprep.subr.bf16.mxu0 0
  %1007 = vmatpush2.bf16.msra.mxu0 0
  %1008 = vmatprep.subr.bf16.mxu0 0
  %1009 = vmatpush2.bf16.msra.mxu0 0
  %1010 = vmatprep.subr.bf16.mxu0 0
  %1011 = vmatpush2.bf16.msra.mxu0 0
  %1012 = vmatprep.subr.bf16.mxu0 0
  %1013 = vmatpush2.bf16.msra.mxu0 0
  %1014 = vmatprep.subr.bf16.mxu0 0
  %1015 = vmatpush2.bf16.msra.mxu0 0
  %1016 = vmatprep.subr.bf16.mxu0 0
  %1017 = vmatpush2.bf16.msra.mxu0 0
  %1018 = vmatprep.mubr.bf16.mxu0 0
  %1019 = vmatmul.mubr.bf16.gmra.mxu0 %v984
  %v1020 = vpop.f32.mrf.mxu0
  %v1021 = vadd.f32 0.0, %v1020
  %v1022 = vpop.f32.mrf.mxu0
  %v1023 = vpop.f32.mrf.mxu0
  %v1024 = vpop.f32.mrf.mxu0
  %1025 = vdwg.mxu0
  %v1026 = vadd.f32 %v969, %v1021
  %v1027 = vxor.u32 %v1026, 2147483648
  %v1028 = vmul.f32 %v1027, 1.442695
  %v1029 = vpow.pop %v1028
  %v1030 = vadd.f32 %v1029, 1.0
  %v1031 = vrcp.pop %v1030
  %v1032 = vmul.f32 1.0, %v1031
  %v1033 = vtanh.pop %v1026
  %1035 = vrot.lane.b32.xlu0 %v968, 32
  %v1036 = vpop.permute.xlu0 %1035
  %v1038 = vmul.f32 %v1032, %v1036
  %1040 = vrot.lane.b32.xlu0 %v1033, 64
  %v1041 = vpop.permute.xlu0 %1040
  %v1043 = vmul.f32 %v1032, %v1041
  %1045 = vrot.lane.b32.xlu0 %v1043, 32
  %v1046 = vpop.permute.xlu0 %1045
  %v1048 = vadd.f32 %v1038, %v1046
  %v1049 = vtanh.pop %v1048
  %1051 = vrot.lane.b32.xlu0 %v1049, 64
  %v1052 = vpop.permute.xlu0 %1051
  %v1054 = vmul.f32 %v1032, %v1052
  %1056 = vrot.lane.b32.xlu0 %v1054, 32
  %v1057 = vpop.permute.xlu0 %1056
  %1059 = vst.msk [vmem:[#allocation5] sm:$0xff] %vm197, %v1057
  %v1060 = vld [vmem:[%s275] sm:$0xff]
  %v1061 = vpack.c.bf16 %v1054, %v1054
  %1063 = vrot.lane.b32.xlu0 %v1061, 32
  %v1064 = vpop.permute.xlu0 %1063
  %v1066 = vsel %vm197, %v1064, 0
  %1068 = vmatprep.subr.bf16.mxu0 0
  %1069 = vmatpush1.bf16.msra.mxu0 0
  %1070 = vmatprep.subr.bf16.mxu0 0
  %1071 = vmatpush1.bf16.msra.mxu0 0
  %1072 = vmatprep.subr.bf16.mxu0 0
  %1073 = vmatpush1.bf16.msra.mxu0 0
  %1074 = vmatprep.subr.bf16.mxu0 0
  %1075 = vmatpush1.bf16.msra.mxu0 0
  %1076 = vmatprep.subr.bf16.mxu0 0
  %1077 = vmatpush1.bf16.msra.mxu0 0
  %1078 = vmatprep.subr.bf16.mxu0 0
  %1079 = vmatpush1.bf16.msra.mxu0 0
  %1080 = vmatprep.subr.bf16.mxu0 0
  %1081 = vmatpush1.bf16.msra.mxu0 %v980
  %1082 = vmatprep.subr.bf16.mxu0 0
  %1083 = vmatpush1.bf16.msra.mxu0 %v979
  %1084 = vmatprep.subr.bf16.mxu0 0
  %1085 = vmatpush2.bf16.msra.mxu0 0
  %1086 = vmatprep.subr.bf16.mxu0 0
  %1087 = vmatpush2.bf16.msra.mxu0 0
  %1088 = vmatprep.subr.bf16.mxu0 0
  %1089 = vmatpush2.bf16.msra.mxu0 0
  %1090 = vmatprep.subr.bf16.mxu0 0
  %1091 = vmatpush2.bf16.msra.mxu0 0
  %1092 = vmatprep.subr.bf16.mxu0 0
  %1093 = vmatpush2.bf16.msra.mxu0 0
  %1094 = vmatprep.subr.bf16.mxu0 0
  %1095 = vmatpush2.bf16.msra.mxu0 0
  %1096 = vmatprep.subr.bf16.mxu0 0
  %1097 = vmatpush2.bf16.msra.mxu0 0
  %1098 = vmatprep.subr.bf16.mxu0 0
  %1099 = vmatpush2.bf16.msra.mxu0 0
  %1100 = vmatprep.mubr.bf16.mxu0 0
  %1101 = vmatmul.mubr.bf16.gmra.mxu0 %v1066
  %v1102 = vpop.f32.mrf.mxu0
  %v1103 = vadd.f32 0.0, %v1102
  %v1104 = vpop.f32.mrf.mxu0
  %v1105 = vpop.f32.mrf.mxu0
  %v1106 = vpop.f32.mrf.mxu0
  %1107 = vdwg.mxu0
  %v1108 = vadd.f32 %v1060, %v1103
  %v1109 = vxor.u32 %v1108, 2147483648
  %v1110 = vmul.f32 %v1109, 1.442695
  %v1111 = vpow.pop %v1110
  %v1112 = vadd.f32 %v1111, 1.0
  %v1113 = vrcp.pop %v1112
  %v1114 = vmul.f32 1.0, %v1113
  %v1115 = vtanh.pop %v1108
  %v1116 = vmul.f32 %v1114, %v1048
  %1118 = vrot.lane.b32.xlu0 %v1115, 64
  %v1119 = vpop.permute.xlu0 %1118
  %v1121 = vmul.f32 %v1114, %v1119
  %1123 = vrot.lane.b32.xlu0 %v1121, 32
  %v1124 = vpop.permute.xlu0 %1123
  %v1126 = vadd.f32 %v1116, %v1124
  %v1127 = vtanh.pop %v1126
  %1129 = vrot.lane.b32.xlu0 %v1127, 64
  %v1130 = vpop.permute.xlu0 %1129
  %v1132 = vmul.f32 %v1114, %v1130
  %1134 = vrot.lane.b32.xlu0 %v1132, 32
  %v1135 = vpop.permute.xlu0 %1134
  %1137 = vst.msk [vmem:[%s353] sm:$0xff] %vm197, %v1135
  %v1138 = vld [vmem:[%s355] sm:$0xff]
  %v1139 = vpack.c.bf16 %v1132, %v1132
  %1141 = vrot.lane.b32.xlu0 %v1139, 32
  %v1142 = vpop.permute.xlu0 %1141
  %v1144 = vsel %vm197, %v1142, 0
  %1146 = vmatprep.subr.bf16.mxu0 0
  %1147 = vmatpush1.bf16.msra.mxu0 0
  %1148 = vmatprep.subr.bf16.mxu0 0
  %1149 = vmatpush1.bf16.msra.mxu0 0
  %1150 = vmatprep.subr.bf16.mxu0 0
  %1151 = vmatpush1.bf16.msra.mxu0 0
  %1152 = vmatprep.subr.bf16.mxu0 0
  %1153 = vmatpush1.bf16.msra.mxu0 0
  %1154 = vmatprep.subr.bf16.mxu0 0
  %1155 = vmatpush1.bf16.msra.mxu0 0
  %1156 = vmatprep.subr.bf16.mxu0 0
  %1157 = vmatpush1.bf16.msra.mxu0 0
  %1158 = vmatprep.subr.bf16.mxu0 0
  %1159 = vmatpush1.bf16.msra.mxu0 %v980
  %1160 = vmatprep.subr.bf16.mxu0 0
  %1161 = vmatpush1.bf16.msra.mxu0 %v979
  %1162 = vmatprep.subr.bf16.mxu0 0
  %1163 = vmatpush2.bf16.msra.mxu0 0
  %1164 = vmatprep.subr.bf16.mxu0 0
  %1165 = vmatpush2.bf16.msra.mxu0 0
  %1166 = vmatprep.subr.bf16.mxu0 0
  %1167 = vmatpush2.bf16.msra.mxu0 0
  %1168 = vmatprep.subr.bf16.mxu0 0
  %1169 = vmatpush2.bf16.msra.mxu0 0
  %1170 = vmatprep.subr.bf16.mxu0 0
  %1171 = vmatpush2.bf16.msra.mxu0 0
  %1172 = vmatprep.subr.bf16.mxu0 0
  %1173 = vmatpush2.bf16.msra.mxu0 0
  %1174 = vmatprep.subr.bf16.mxu0 0
  %1175 = vmatpush2.bf16.msra.mxu0 0
  %1176 = vmatprep.subr.bf16.mxu0 0
  %1177 = vmatpush2.bf16.msra.mxu0 0
  %1178 = vmatprep.mubr.bf16.mxu0 0
  %1179 = vmatmul.mubr.bf16.gmra.mxu0 %v1144
  %v1180 = vpop.f32.mrf.mxu0
  %v1181 = vadd.f32 0.0, %v1180
  %v1182 = vpop.f32.mrf.mxu0
  %v1183 = vpop.f32.mrf.mxu0
  %v1184 = vpop.f32.mrf.mxu0
  %1185 = vdwg.mxu0
  %v1186 = vadd.f32 %v1138, %v1181
  %v1187 = vxor.u32 %v1186, 2147483648
  %v1188 = vmul.f32 %v1187, 1.442695
  %v1189 = vpow.pop %v1188
  %v1190 = vadd.f32 %v1189, 1.0
  %v1191 = vrcp.pop %v1190
  %v1192 = vmul.f32 1.0, %v1191
  %v1193 = vtanh.pop %v1186
  %v1194 = vmul.f32 %v1192, %v1126
  %1196 = vrot.lane.b32.xlu0 %v1193, 64
  %v1197 = vpop.permute.xlu0 %1196
  %v1199 = vmul.f32 %v1192, %v1197
  %1201 = vrot.lane.b32.xlu0 %v1199, 32
  %v1202 = vpop.permute.xlu0 %1201
  %v1204 = vadd.f32 %v1194, %v1202
  %v1205 = vtanh.pop %v1204
  %1207 = vrot.lane.b32.xlu0 %v1205, 64
  %v1208 = vpop.permute.xlu0 %1207
  %v1210 = vmul.f32 %v1192, %v1208
  %1212 = vrot.lane.b32.xlu0 %v1210, 32
  %v1213 = vpop.permute.xlu0 %1212
  %1215 = vst.msk [vmem:[%s433] sm:$0xff] %vm197, %v1213
  %v1216 = vld [vmem:[%s435] sm:$0xff]
  %v1217 = vpack.c.bf16 %v1210, %v1210
  %1219 = vrot.lane.b32.xlu0 %v1217, 32
  %v1220 = vpop.permute.xlu0 %1219
  %v1222 = vsel %vm197, %v1220, 0
  %1224 = vmatprep.subr.bf16.mxu0 0
  %1225 = vmatpush1.bf16.msra.mxu0 0
  %1226 = vmatprep.subr.bf16.mxu0 0
  %1227 = vmatpush1.bf16.msra.mxu0 0
  %1228 = vmatprep.subr.bf16.mxu0 0
  %1229 = vmatpush1.bf16.msra.mxu0 0
  %1230 = vmatprep.subr.bf16.mxu0 0
  %1231 = vmatpush1.bf16.msra.mxu0 0
  %1232 = vmatprep.subr.bf16.mxu0 0
  %1233 = vmatpush1.bf16.msra.mxu0 0
  %1234 = vmatprep.subr.bf16.mxu0 0
  %1235 = vmatpush1.bf16.msra.mxu0 0
  %1236 = vmatprep.subr.bf16.mxu0 0
  %1237 = vmatpush1.bf16.msra.mxu0 %v980
  %1238 = vmatprep.subr.bf16.mxu0 0
  %1239 = vmatpush1.bf16.msra.mxu0 %v979
  %1240 = vmatprep.subr.bf16.mxu0 0
  %1241 = vmatpush2.bf16.msra.mxu0 0
  %1242 = vmatprep.subr.bf16.mxu0 0
  %1243 = vmatpush2.bf16.msra.mxu0 0
  %1244 = vmatprep.subr.bf16.mxu0 0
  %1245 = vmatpush2.bf16.msra.mxu0 0
  %1246 = vmatprep.subr.bf16.mxu0 0
  %1247 = vmatpush2.bf16.msra.mxu0 0
  %1248 = vmatprep.subr.bf16.mxu0 0
  %1249 = vmatpush2.bf16.msra.mxu0 0
  %1250 = vmatprep.subr.bf16.mxu0 0
  %1251 = vmatpush2.bf16.msra.mxu0 0
  %1252 = vmatprep.subr.bf16.mxu0 0
  %1253 = vmatpush2.bf16.msra.mxu0 0
  %1254 = vmatprep.subr.bf16.mxu0 0
  %1255 = vmatpush2.bf16.msra.mxu0 0
  %1256 = vmatprep.mubr.bf16.mxu0 0
  %1257 = vmatmul.mubr.bf16.gmra.mxu0 %v1222
  %v1258 = vpop.f32.mrf.mxu0
  %v1259 = vadd.f32 0.0, %v1258
  %v1260 = vpop.f32.mrf.mxu0
  %v1261 = vpop.f32.mrf.mxu0
  %v1262 = vpop.f32.mrf.mxu0
  %1263 = vdwg.mxu0
  %v1264 = vadd.f32 %v1216, %v1259
  %v1265 = vxor.u32 %v1264, 2147483648
  %v1266 = vmul.f32 %v1265, 1.442695
  %v1267 = vpow.pop %v1266
  %v1268 = vadd.f32 %v1267, 1.0
  %v1269 = vrcp.pop %v1268
  %v1270 = vmul.f32 1.0, %v1269
  %v1271 = vtanh.pop %v1264
  %v1272 = vmul.f32 %v1270, %v1204
  %1274 = vrot.lane.b32.xlu0 %v1271, 64
  %v1275 = vpop.permute.xlu0 %1274
  %v1277 = vmul.f32 %v1270, %v1275
  %1279 = vrot.lane.b32.xlu0 %v1277, 32
  %v1280 = vpop.permute.xlu0 %1279
  %v1282 = vadd.f32 %v1272, %v1280
  %v1283 = vtanh.pop %v1282
  %1285 = vrot.lane.b32.xlu0 %v1283, 64
  %v1286 = vpop.permute.xlu0 %1285
  %v1288 = vmul.f32 %v1270, %v1286
  %1290 = vrot.lane.b32.xlu0 %v1288, 32
  %v1291 = vpop.permute.xlu0 %1290
  %1293 = vst.msk [vmem:[%s513] sm:$0xff] %vm197, %v1291
  %v1294 = vld [vmem:[%s515] sm:$0xff]
  %v1295 = vpack.c.bf16 %v1288, %v1288
  %1297 = vrot.lane.b32.xlu0 %v1295, 32
  %v1298 = vpop.permute.xlu0 %1297
  %v1300 = vsel %vm197, %v1298, 0
  %1302 = vmatprep.subr.bf16.mxu0 0
  %1303 = vmatpush1.bf16.msra.mxu0 0
  %1304 = vmatprep.subr.bf16.mxu0 0
  %1305 = vmatpush1.bf16.msra.mxu0 0
  %1306 = vmatprep.subr.bf16.mxu0 0
  %1307 = vmatpush1.bf16.msra.mxu0 0
  %1308 = vmatprep.subr.bf16.mxu0 0
  %1309 = vmatpush1.bf16.msra.mxu0 0
  %1310 = vmatprep.subr.bf16.mxu0 0
  %1311 = vmatpush1.bf16.msra.mxu0 0
  %1312 = vmatprep.subr.bf16.mxu0 0
  %1313 = vmatpush1.bf16.msra.mxu0 0
  %1314 = vmatprep.subr.bf16.mxu0 0
  %1315 = vmatpush1.bf16.msra.mxu0 %v980
  %1316 = vmatprep.subr.bf16.mxu0 0
  %1317 = vmatpush1.bf16.msra.mxu0 %v979
  %1318 = vmatprep.subr.bf16.mxu0 0
  %1319 = vmatpush2.bf16.msra.mxu0 0
  %1320 = vmatprep.subr.bf16.mxu0 0
  %1321 = vmatpush2.bf16.msra.mxu0 0
  %1322 = vmatprep.subr.bf16.mxu0 0
  %1323 = vmatpush2.bf16.msra.mxu0 0
  %1324 = vmatprep.subr.bf16.mxu0 0
  %1325 = vmatpush2.bf16.msra.mxu0 0
  %1326 = vmatprep.subr.bf16.mxu0 0
  %1327 = vmatpush2.bf16.msra.mxu0 0
  %1328 = vmatprep.subr.bf16.mxu0 0
  %1329 = vmatpush2.bf16.msra.mxu0 0
  %1330 = vmatprep.subr.bf16.mxu0 0
  %1331 = vmatpush2.bf16.msra.mxu0 0
  %1332 = vmatprep.subr.bf16.mxu0 0
  %1333 = vmatpush2.bf16.msra.mxu0 0
  %1334 = vmatprep.mubr.bf16.mxu0 0
  %1335 = vmatmul.mubr.bf16.gmra.mxu0 %v1300
  %v1336 = vpop.f32.mrf.mxu0
  %v1337 = vadd.f32 0.0, %v1336
  %v1338 = vpop.f32.mrf.mxu0
  %v1339 = vpop.f32.mrf.mxu0
  %v1340 = vpop.f32.mrf.mxu0
  %1341 = vdwg.mxu0
  %v1342 = vadd.f32 %v1294, %v1337
  %v1343 = vxor.u32 %v1342, 2147483648
  %v1344 = vmul.f32 %v1343, 1.442695
  %v1345 = vpow.pop %v1344
  %v1346 = vadd.f32 %v1345, 1.0
  %v1347 = vrcp.pop %v1346
  %v1348 = vmul.f32 1.0, %v1347
  %v1349 = vtanh.pop %v1342
  %v1350 = vmul.f32 %v1348, %v1282
  %1352 = vrot.lane.b32.xlu0 %v1349, 64
  %v1353 = vpop.permute.xlu0 %1352
  %v1355 = vmul.f32 %v1348, %v1353
  %1357 = vrot.lane.b32.xlu0 %v1355, 32
  %v1358 = vpop.permute.xlu0 %1357
  %v1360 = vadd.f32 %v1350, %v1358
  %v1361 = vtanh.pop %v1360
  %1363 = vrot.lane.b32.xlu0 %v1361, 64
  %v1364 = vpop.permute.xlu0 %1363
  %v1366 = vmul.f32 %v1348, %v1364
  %1368 = vrot.lane.b32.xlu0 %v1366, 32
  %v1369 = vpop.permute.xlu0 %1368
  %1371 = vst.msk [vmem:[%s593] sm:$0xff] %vm197, %v1369
  %v1372 = vld [vmem:[%s595] sm:$0xff]
  %v1373 = vpack.c.bf16 %v1366, %v1366
  %1375 = vrot.lane.b32.xlu0 %v1373, 32
  %v1376 = vpop.permute.xlu0 %1375
  %v1378 = vsel %vm197, %v1376, 0
  %1380 = vmatprep.subr.bf16.mxu0 0
  %1381 = vmatpush1.bf16.msra.mxu0 0
  %1382 = vmatprep.subr.bf16.mxu0 0
  %1383 = vmatpush1.bf16.msra.mxu0 0
  %1384 = vmatprep.subr.bf16.mxu0 0
  %1385 = vmatpush1.bf16.msra.mxu0 0
  %1386 = vmatprep.subr.bf16.mxu0 0
  %1387 = vmatpush1.bf16.msra.mxu0 0
  %1388 = vmatprep.subr.bf16.mxu0 0
  %1389 = vmatpush1.bf16.msra.mxu0 0
  %1390 = vmatprep.subr.bf16.mxu0 0
  %1391 = vmatpush1.bf16.msra.mxu0 0
  %1392 = vmatprep.subr.bf16.mxu0 0
  %1393 = vmatpush1.bf16.msra.mxu0 %v980
  %1394 = vmatprep.subr.bf16.mxu0 0
  %1395 = vmatpush1.bf16.msra.mxu0 %v979
  %1396 = vmatprep.subr.bf16.mxu0 0
  %1397 = vmatpush2.bf16.msra.mxu0 0
  %1398 = vmatprep.subr.bf16.mxu0 0
  %1399 = vmatpush2.bf16.msra.mxu0 0
  %1400 = vmatprep.subr.bf16.mxu0 0
  %1401 = vmatpush2.bf16.msra.mxu0 0
  %1402 = vmatprep.subr.bf16.mxu0 0
  %1403 = vmatpush2.bf16.msra.mxu0 0
  %1404 = vmatprep.subr.bf16.mxu0 0
  %1405 = vmatpush2.bf16.msra.mxu0 0
  %1406 = vmatprep.subr.bf16.mxu0 0
  %1407 = vmatpush2.bf16.msra.mxu0 0
  %1408 = vmatprep.subr.bf16.mxu0 0
  %1409 = vmatpush2.bf16.msra.mxu0 0
  %1410 = vmatprep.subr.bf16.mxu0 0
  %1411 = vmatpush2.bf16.msra.mxu0 0
  %1412 = vmatprep.mubr.bf16.mxu0 0
  %1413 = vmatmul.mubr.bf16.gmra.mxu0 %v1378
  %v1414 = vpop.f32.mrf.mxu0
  %v1415 = vadd.f32 0.0, %v1414
  %v1416 = vpop.f32.mrf.mxu0
  %v1417 = vpop.f32.mrf.mxu0
  %v1418 = vpop.f32.mrf.mxu0
  %1419 = vdwg.mxu0
  %v1420 = vadd.f32 %v1372, %v1415
  %v1421 = vxor.u32 %v1420, 2147483648
  %v1422 = vmul.f32 %v1421, 1.442695
  %v1423 = vpow.pop %v1422
  %v1424 = vadd.f32 %v1423, 1.0
  %v1425 = vrcp.pop %v1424
  %v1426 = vmul.f32 1.0, %v1425
  %v1427 = vtanh.pop %v1420
  %v1428 = vmul.f32 %v1426, %v1360
  %1430 = vrot.lane.b32.xlu0 %v1427, 64
  %v1431 = vpop.permute.xlu0 %1430
  %v1433 = vmul.f32 %v1426, %v1431
  %1435 = vrot.lane.b32.xlu0 %v1433, 32
  %v1436 = vpop.permute.xlu0 %1435
  %v1438 = vadd.f32 %v1428, %v1436
  %v1439 = vtanh.pop %v1438
  %1441 = vrot.lane.b32.xlu0 %v1439, 64
  %v1442 = vpop.permute.xlu0 %1441
  %v1444 = vmul.f32 %v1426, %v1442
  %1446 = vrot.lane.b32.xlu0 %v1444, 32
  %v1447 = vpop.permute.xlu0 %1446
  %1449 = vst.msk [vmem:[%s673] sm:$0xff] %vm197, %v1447
  %v1450 = vld [vmem:[%s675] sm:$0xff]
  %v1451 = vpack.c.bf16 %v1444, %v1444
  %1453 = vrot.lane.b32.xlu0 %v1451, 32
  %v1454 = vpop.permute.xlu0 %1453
  %v1456 = vsel %vm197, %v1454, 0
  %1458 = vmatprep.subr.bf16.mxu0 0
  %1459 = vmatpush1.bf16.msra.mxu0 0
  %1460 = vmatprep.subr.bf16.mxu0 0
  %1461 = vmatpush1.bf16.msra.mxu0 0
  %1462 = vmatprep.subr.bf16.mxu0 0
  %1463 = vmatpush1.bf16.msra.mxu0 0
  %1464 = vmatprep.subr.bf16.mxu0 0
  %1465 = vmatpush1.bf16.msra.mxu0 0
  %1466 = vmatprep.subr.bf16.mxu0 0
  %1467 = vmatpush1.bf16.msra.mxu0 0
  %1468 = vmatprep.subr.bf16.mxu0 0
  %1469 = vmatpush1.bf16.msra.mxu0 0
  %1470 = vmatprep.subr.bf16.mxu0 0
  %1471 = vmatpush1.bf16.msra.mxu0 %v980
  %1472 = vmatprep.subr.bf16.mxu0 0
  %1473 = vmatpush1.bf16.msra.mxu0 %v979
  %1474 = vmatprep.subr.bf16.mxu0 0
  %1475 = vmatpush2.bf16.msra.mxu0 0
  %1476 = vmatprep.subr.bf16.mxu0 0
  %1477 = vmatpush2.bf16.msra.mxu0 0
  %1478 = vmatprep.subr.bf16.mxu0 0
  %1479 = vmatpush2.bf16.msra.mxu0 0
  %1480 = vmatprep.subr.bf16.mxu0 0
  %1481 = vmatpush2.bf16.msra.mxu0 0
  %1482 = vmatprep.subr.bf16.mxu0 0
  %1483 = vmatpush2.bf16.msra.mxu0 0
  %1484 = vmatprep.subr.bf16.mxu0 0
  %1485 = vmatpush2.bf16.msra.mxu0 0
  %1486 = vmatprep.subr.bf16.mxu0 0
  %1487 = vmatpush2.bf16.msra.mxu0 0
  %1488 = vmatprep.subr.bf16.mxu0 0
  %1489 = vmatpush2.bf16.msra.mxu0 0
  %1490 = vmatprep.mubr.bf16.mxu0 0
  %1491 = vmatmul.mubr.bf16.gmra.mxu0 %v1456
  %v1492 = vpop.f32.mrf.mxu0
  %v1493 = vadd.f32 0.0, %v1492
  %v1494 = vpop.f32.mrf.mxu0
  %v1495 = vpop.f32.mrf.mxu0
  %v1496 = vpop.f32.mrf.mxu0
  %1497 = vdwg.mxu0
  %v1498 = vadd.f32 %v1450, %v1493
  %v1499 = vxor.u32 %v1498, 2147483648
  %v1500 = vmul.f32 %v1499, 1.442695
  %v1501 = vpow.pop %v1500
  %v1502 = vadd.f32 %v1501, 1.0
  %v1503 = vrcp.pop %v1502
  %v1504 = vmul.f32 1.0, %v1503
  %v1505 = vtanh.pop %v1498
  %v1506 = vmul.f32 %v1504, %v1438
  %1508 = vrot.lane.b32.xlu0 %v1505, 64
  %v1509 = vpop.permute.xlu0 %1508
  %v1511 = vmul.f32 %v1504, %v1509
  %1513 = vrot.lane.b32.xlu0 %v1511, 32
  %v1514 = vpop.permute.xlu0 %1513
  %v1516 = vadd.f32 %v1506, %v1514
  %v1517 = vtanh.pop %v1516
  %1519 = vrot.lane.b32.xlu0 %v1517, 64
  %v1520 = vpop.permute.xlu0 %1519
  %v1522 = vmul.f32 %v1504, %v1520
  %1524 = vrot.lane.b32.xlu0 %v1522, 32
  %v1525 = vpop.permute.xlu0 %1524
  %1527 = vst.msk [vmem:[%s753] sm:$0xff] %vm197, %v1525
  %v1528 = vld [vmem:[%s755] sm:$0xff]
  %v1529 = vpack.c.bf16 %v1522, %v1522
  %1531 = vrot.lane.b32.xlu0 %v1529, 32
  %v1532 = vpop.permute.xlu0 %1531
  %v1534 = vsel %vm197, %v1532, 0
  %1536 = vmatprep.subr.bf16.mxu0 0
  %1537 = vmatpush1.bf16.msra.mxu0 0
  %1538 = vmatprep.subr.bf16.mxu0 0
  %1539 = vmatpush1.bf16.msra.mxu0 0
  %1540 = vmatprep.subr.bf16.mxu0 0
  %1541 = vmatpush1.bf16.msra.mxu0 0
  %1542 = vmatprep.subr.bf16.mxu0 0
  %1543 = vmatpush1.bf16.msra.mxu0 0
  %1544 = vmatprep.subr.bf16.mxu0 0
  %1545 = vmatpush1.bf16.msra.mxu0 0
  %1546 = vmatprep.subr.bf16.mxu0 0
  %1547 = vmatpush1.bf16.msra.mxu0 0
  %1548 = vmatprep.subr.bf16.mxu0 0
  %1549 = vmatpush1.bf16.msra.mxu0 %v980
  %1550 = vmatprep.subr.bf16.mxu0 0
  %1551 = vmatpush1.bf16.msra.mxu0 %v979
  %1552 = vmatprep.subr.bf16.mxu0 0
  %1553 = vmatpush2.bf16.msra.mxu0 0
  %1554 = vmatprep.subr.bf16.mxu0 0
  %1555 = vmatpush2.bf16.msra.mxu0 0
  %1556 = vmatprep.subr.bf16.mxu0 0
  %1557 = vmatpush2.bf16.msra.mxu0 0
  %1558 = vmatprep.subr.bf16.mxu0 0
  %1559 = vmatpush2.bf16.msra.mxu0 0
  %1560 = vmatprep.subr.bf16.mxu0 0
  %1561 = vmatpush2.bf16.msra.mxu0 0
  %1562 = vmatprep.subr.bf16.mxu0 0
  %1563 = vmatpush2.bf16.msra.mxu0 0
  %1564 = vmatprep.subr.bf16.mxu0 0
  %1565 = vmatpush2.bf16.msra.mxu0 0
  %1566 = vmatprep.subr.bf16.mxu0 0
  %1567 = vmatpush2.bf16.msra.mxu0 0
  %1568 = vmatprep.mubr.bf16.mxu0 0
  %1569 = vmatmul.mubr.bf16.gmra.mxu0 %v1534
  %v1570 = vpop.f32.mrf.mxu0
  %v1571 = vadd.f32 0.0, %v1570
  %v1572 = vpop.f32.mrf.mxu0
  %v1573 = vpop.f32.mrf.mxu0
  %v1574 = vpop.f32.mrf.mxu0
  %1575 = vdwg.mxu0
  %v1576 = vadd.f32 %v1528, %v1571
  %v1577 = vxor.u32 %v1576, 2147483648
  %v1578 = vmul.f32 %v1577, 1.442695
  %v1579 = vpow.pop %v1578
  %v1580 = vadd.f32 %v1579, 1.0
  %v1581 = vrcp.pop %v1580
  %v1582 = vmul.f32 1.0, %v1581
  %v1583 = vtanh.pop %v1576
  %v1584 = vmul.f32 %v1582, %v1516
  %1586 = vrot.lane.b32.xlu0 %v1583, 64
  %v1587 = vpop.permute.xlu0 %1586
  %v1589 = vmul.f32 %v1582, %v1587
  %1591 = vrot.lane.b32.xlu0 %v1589, 32
  %v1592 = vpop.permute.xlu0 %1591
  %v1594 = vadd.f32 %v1584, %v1592
  %v1595 = vtanh.pop %v1594
  %1597 = vrot.lane.b32.xlu0 %v1595, 64
  %v1598 = vpop.permute.xlu0 %1597
  %v1600 = vmul.f32 %v1582, %v1598
  %1602 = vrot.lane.b32.xlu0 %v1600, 32
  %v1603 = vpop.permute.xlu0 %1602
  %1605 = vst.msk [vmem:[%s833] sm:$0xff] %vm197, %v1603
  %1606 = vst.msk [vmem:[%s965] sm:$0xff] %vm197, %v1603
  %1608 = vrot.lane.b32.xlu0 %v1594, 96
  %v1609 = vpop.permute.xlu0 %1608
  %1611 = vst.msk [vmem:[%s967] sm:$0xff] %vm197, %v1609
  %v1612 = vld [vmem:[#allocation5] sm:$0xff]
  %v1613 = vld [vmem:[#allocation5 + $0x8] sm:$0xff]
  %v1614 = vld [vmem:[#allocation5 + $0x10] sm:$0xff]
  %v1615 = vld [vmem:[#allocation5 + $0x18] sm:$0xff]
  %v1616 = vld [vmem:[#allocation5 + $0x20] sm:$0xff]
  %v1617 = vld [vmem:[#allocation5 + $0x28] sm:$0xff]
  %v1618 = vld [vmem:[#allocation5 + $0x30] sm:$0xff]
  %v1619 = vld [vmem:[#allocation5 + $0x38] sm:$0xff]
  %v1620 = vpack.c.bf16 %v1613, %v1612
  %v1621 = vpack.c.bf16 %v1615, %v1614
  %v1622 = vpack.c.bf16 %v1617, %v1616
  %v1623 = vpack.c.bf16 %v1619, %v1618
  %v1624 = vld [vmem:[%s7] sm:$0xf]
  %v1625 = vld [vmem:[%s7 + $0x4] sm:$0xf]
  %v1626 = vld [vmem:[%s7 + $0x8] sm:$0xf]
  %v1627 = vld [vmem:[%s7 + $0xc] sm:$0xf]
  %v1628 = vld [vmem:[%s8] sm:$0x1]
  %v1630 = vlaneseq
  %v1631 = vshrl.u32 %v1630, 7
  %v1632 = vsub.s32 0, %v1631
  %v1633 = vrot.slane %v1628, %v1632
  %v1639 = vunpack.c.l.b16 %v1624
  %v1640 = vunpack.c.l.b16 %v1625
  %v1641 = vunpack.c.l.b16 %v1626
  %v1642 = vunpack.c.l.b16 %v1627
  %v1643 = vpack.c.b16 %v1640, %v1639
  %v1644 = vpack.c.b16 %v1642, %v1641
  %v1648 = vsel %vm197, %v1620, 0
  %v1651 = vsel %vm197, %v1621, 0
  %v1654 = vsel %vm197, %v1622, 0
  %v1657 = vsel %vm197, %v1623, 0
  %1659 = vmatprep.subr.bf16.mxu0 0
  %1660 = vmatpush1.bf16.msra.mxu0 0
  %1661 = vmatprep.subr.bf16.mxu0 0
  %1662 = vmatpush1.bf16.msra.mxu0 0
  %1663 = vmatprep.subr.bf16.mxu0 0
  %1664 = vmatpush1.bf16.msra.mxu0 0
  %1665 = vmatprep.subr.bf16.mxu0 0
  %1666 = vmatpush1.bf16.msra.mxu0 0
  %1667 = vmatprep.subr.bf16.mxu0 0
  %1668 = vmatpush1.bf16.msra.mxu0 0
  %1669 = vmatprep.subr.bf16.mxu0 0
  %1670 = vmatpush1.bf16.msra.mxu0 0
  %1671 = vmatprep.subr.bf16.mxu0 0
  %1672 = vmatpush1.bf16.msra.mxu0 %v1644
  %1673 = vmatprep.subr.bf16.mxu0 0
  %1674 = vmatpush1.bf16.msra.mxu0 %v1643
  %1675 = vmatprep.subr.bf16.mxu0 0
  %1676 = vmatpush2.bf16.msra.mxu0 0
  %1677 = vmatprep.subr.bf16.mxu0 0
  %1678 = vmatpush2.bf16.msra.mxu0 0
  %1679 = vmatprep.subr.bf16.mxu0 0
  %1680 = vmatpush2.bf16.msra.mxu0 0
  %1681 = vmatprep.subr.bf16.mxu0 0
  %1682 = vmatpush2.bf16.msra.mxu0 0
  %1683 = vmatprep.subr.bf16.mxu0 0
  %1684 = vmatpush2.bf16.msra.mxu0 0
  %1685 = vmatprep.subr.bf16.mxu0 0
  %1686 = vmatpush2.bf16.msra.mxu0 0
  %1687 = vmatprep.subr.bf16.mxu0 0
  %1688 = vmatpush2.bf16.msra.mxu0 0
  %1689 = vmatprep.subr.bf16.mxu0 0
  %1690 = vmatpush2.bf16.msra.mxu0 0
  %1691 = vmatprep.mubr.bf16.mxu0 0
  %1692 = vmatmul.mubr.bf16.gmra.mxu0 %v1648
  %v1693 = vpop.f32.mrf.mxu0
  %v1694 = vadd.f32 %v1633, %v1693
  %v1695 = vpop.f32.mrf.mxu0
  %v1696 = vpop.f32.mrf.mxu0
  %v1697 = vadd.f32 %v1633, %v1696
  %v1698 = vpop.f32.mrf.mxu0
  %1699 = vmatprep.mubr.bf16.mxu0 0
  %1700 = vmatmul.mubr.bf16.gmra.mxu0 %v1651
  %v1701 = vpop.f32.mrf.mxu0
  %v1702 = vadd.f32 %v1633, %v1701
  %v1703 = vpop.f32.mrf.mxu0
  %v1704 = vpop.f32.mrf.mxu0
  %v1705 = vadd.f32 %v1633, %v1704
  %v1706 = vpop.f32.mrf.mxu0
  %1707 = vmatprep.mubr.bf16.mxu0 0
  %1708 = vmatmul.mubr.bf16.gmra.mxu0 %v1654
  %v1709 = vpop.f32.mrf.mxu0
  %v1710 = vadd.f32 %v1633, %v1709
  %v1711 = vpop.f32.mrf.mxu0
  %v1712 = vpop.f32.mrf.mxu0
  %v1713 = vadd.f32 %v1633, %v1712
  %v1714 = vpop.f32.mrf.mxu0
  %1715 = vmatprep.mubr.bf16.mxu0 0
  %1716 = vmatmul.mubr.bf16.gmra.mxu0 %v1657
  %v1717 = vpop.f32.mrf.mxu0
  %v1718 = vadd.f32 %v1633, %v1717
  %v1719 = vpop.f32.mrf.mxu0
  %v1720 = vpop.f32.mrf.mxu0
  %v1721 = vadd.f32 %v1633, %v1720
  %v1722 = vpop.f32.mrf.mxu0
  %1723 = vdwg.mxu0
  %v1724 = vmax.f32 %v1694, 0.0
  %v1725 = vmax.f32 %v1697, 0.0
  %v1726 = vmax.f32 %v1702, 0.0
  %v1727 = vmax.f32 %v1705, 0.0
  %v1728 = vmax.f32 %v1710, 0.0
  %v1729 = vmax.f32 %v1713, 0.0
  %v1730 = vmax.f32 %v1718, 0.0
  %v1731 = vmax.f32 %v1721, 0.0
  %v1732 = vpack.c.bf16 %v1725, %v1724
  %v1733 = vpack.c.bf16 %v1727, %v1726
  %v1734 = vpack.c.bf16 %v1729, %v1728
  %v1735 = vpack.c.bf16 %v1731, %v1730
  %v1736 = vld [vmem:[%s9] sm:$0xf]
  %v1737 = vld [vmem:[%s9 + $0x4] sm:$0xf]
  %v1738 = vld [vmem:[%s10] sm:$0x1]
  %v1740 = vlaneseq
  %v1741 = vshrl.u32 %v1740, 7
  %v1742 = vsub.s32 0, %v1741
  %v1743 = vrot.slane %v1738, %v1742
  %v1747 = vunpack.c.l.b16 %v1736
  %v1748 = vunpack.c.l.b16 %v1737
  %v1749 = vpack.c.b16 %v1748, %v1747
  %v1752 = vsel %vm91, %v1732, 0
  %v1755 = vsel %vm91, %v1733, 0
  %v1758 = vsel %vm91, %v1734, 0
  %v1761 = vsel %vm91, %v1735, 0
  %1763 = vmatprep.subr.bf16.mxu0 0
  %1764 = vmatpush1.bf16.msra.mxu0 0
  %1765 = vmatprep.subr.bf16.mxu0 0
  %1766 = vmatpush1.bf16.msra.mxu0 0
  %1767 = vmatprep.subr.bf16.mxu0 0
  %1768 = vmatpush1.bf16.msra.mxu0 0
  %1769 = vmatprep.subr.bf16.mxu0 0
  %1770 = vmatpush1.bf16.msra.mxu0 0
  %1771 = vmatprep.subr.bf16.mxu0 0
  %1772 = vmatpush1.bf16.msra.mxu0 0
  %1773 = vmatprep.subr.bf16.mxu0 0
  %1774 = vmatpush1.bf16.msra.mxu0 0
  %1775 = vmatprep.subr.bf16.mxu0 0
  %1776 = vmatpush1.bf16.msra.mxu0 0
  %1777 = vmatprep.subr.bf16.mxu0 0
  %1778 = vmatpush1.bf16.msra.mxu0 %v1749
  %1779 = vmatprep.subr.bf16.mxu0 0
  %1780 = vmatpush2.bf16.msra.mxu0 0
  %1781 = vmatprep.subr.bf16.mxu0 0
  %1782 = vmatpush2.bf16.msra.mxu0 0
  %1783 = vmatprep.subr.bf16.mxu0 0
  %1784 = vmatpush2.bf16.msra.mxu0 0
  %1785 = vmatprep.subr.bf16.mxu0 0
  %1786 = vmatpush2.bf16.msra.mxu0 0
  %1787 = vmatprep.subr.bf16.mxu0 0
  %1788 = vmatpush2.bf16.msra.mxu0 0
  %1789 = vmatprep.subr.bf16.mxu0 0
  %1790 = vmatpush2.bf16.msra.mxu0 0
  %1791 = vmatprep.subr.bf16.mxu0 0
  %1792 = vmatpush2.bf16.msra.mxu0 0
  %1793 = vmatprep.subr.bf16.mxu0 0
  %1794 = vmatpush2.bf16.msra.mxu0 0
  %1795 = vmatprep.mubr.bf16.mxu0 0
  %1796 = vmatmul.mubr.bf16.gmra.mxu0 %v1752
  %v1797 = vpop.f32.mrf.mxu0
  %v1798 = vadd.f32 %v1743, %v1797
  %v1799 = vpop.f32.mrf.mxu0
  %v1800 = vpop.f32.mrf.mxu0
  %v1801 = vadd.f32 %v1743, %v1800
  %v1802 = vpop.f32.mrf.mxu0
  %1803 = vmatprep.mubr.bf16.mxu0 0
  %1804 = vmatmul.mubr.bf16.gmra.mxu0 %v1755
  %v1805 = vpop.f32.mrf.mxu0
  %v1806 = vadd.f32 %v1743, %v1805
  %v1807 = vpop.f32.mrf.mxu0
  %v1808 = vpop.f32.mrf.mxu0
  %v1809 = vadd.f32 %v1743, %v1808
  %v1810 = vpop.f32.mrf.mxu0
  %1811 = vmatprep.mubr.bf16.mxu0 0
  %1812 = vmatmul.mubr.bf16.gmra.mxu0 %v1758
  %v1813 = vpop.f32.mrf.mxu0
  %v1814 = vadd.f32 %v1743, %v1813
  %v1815 = vpop.f32.mrf.mxu0
  %v1816 = vpop.f32.mrf.mxu0
  %v1817 = vadd.f32 %v1743, %v1816
  %v1818 = vpop.f32.mrf.mxu0
  %1819 = vmatprep.mubr.bf16.mxu0 0
  %1820 = vmatmul.mubr.bf16.gmra.mxu0 %v1761
  %v1821 = vpop.f32.mrf.mxu0
  %v1822 = vadd.f32 %v1743, %v1821
  %v1823 = vpop.f32.mrf.mxu0
  %v1824 = vpop.f32.mrf.mxu0
  %v1825 = vadd.f32 %v1743, %v1824
  %v1826 = vpop.f32.mrf.mxu0
  %1827 = vdwg.mxu0
  %1828 = vst [vmem:[%s11] sm:$0xff] %v1798
  %1829 = vst [vmem:[%s11 + $0x8] sm:$0xff] %v1801
  %1830 = vst [vmem:[%s11 + $0x10] sm:$0xff] %v1806
  %1831 = vst [vmem:[%s11 + $0x18] sm:$0xff] %v1809
  %1832 = vst [vmem:[%s11 + $0x20] sm:$0xff] %v1814
  %1833 = vst [vmem:[%s11 + $0x28] sm:$0xff] %v1817
  %1834 = vst [vmem:[%s11 + $0x30] sm:$0xff] %v1822
  %1835 = vst [vmem:[%s11 + $0x38] sm:$0xff] %v1825
  // Predicated region
  $region50: #{lstm_gru_rnn_forward.1} parent=0 // pred_check
    _
  $region51: #{lstm_gru_rnn_forward.1} parent=0 // pred_check_branch
    %1837 = sbr.rel (0) target = $region53
  $region52: #{lstm_gru_rnn_forward.1} parent=0 // pred_region
    _
  $region53: #{lstm_gru_rnn_forward.1} parent=0 // pred_fallthru
    _
  // Predicated region
  $region54: #{lstm_gru_rnn_forward.1} parent=0 // pred_check
    _
  $region55: #{lstm_gru_rnn_forward.1} parent=0 // pred_check_branch
    %1839 = sbr.rel (0) target = $region57
  $region56: #{lstm_gru_rnn_forward.1} parent=0 // pred_region
    _
  $region57: #{lstm_gru_rnn_forward.1} parent=0 // pred_fallthru
    _

</llo_original>
